<compile_context>
chip_gen: v6e
topology: v6e:2x2x1
jax: 0.10.0
libtpu: 0.0.40
codegen_flags: <defaults>
</compile_context>

<pallas_src>
import functools

import jax
import jax.numpy as jnp
from jax.experimental import pallas as pl
from jax.experimental.pallas import tpu as pltpu


_NEG = -1e30  # pads class-logit bias so padded lanes vanish from the softmax


def _lstm_model_kernel(
    x_ref,     # (T*B, D)          time-major flattened input
    w_ref,     # (D + 2*HP, 4*HP)  packed [W_ih^T ; W_hh^T ; W12 (cols 0:CP)]
    b_ref,     # (1, 4*HP + CP)    packed [b_ih+b_hh (gate-padded) ; b12]
    out_ref,   # (B, CP)           padded log-softmax output (lane-dense store)
    *,
    seq_len: int,
    batch: int,
    d: int,
    hp: int,
    cp: int,
):
    # Static, tile-aligned views into the packed parameter slabs (free).
    wih = w_ref[0:d, :]                         # (D, 4*HP)
    whh = w_ref[d:d + hp, :]                    # (HP, 4*HP)
    w12 = w_ref[d + hp:d + 2 * hp, 0:cp]        # (HP, CP)   folded dense1·dense2
    b_lstm = b_ref[:, 0:4 * hp]                 # (1, 4*HP)
    b12 = b_ref[:, 4 * hp:4 * hp + cp]          # (1, CP)    -1e30 in padded lanes

    # Hoisted input projection for ALL time steps at once: one big MXU matmul
    # (T*B, D) x (D, 4*HP) instead of T tiny ones on the recurrence path.
    gates_x = (
        jnp.dot(x_ref[...], wih, preferred_element_type=jnp.float32) + b_lstm
    )  # (T*B, 4*HP)

    h = jnp.zeros((batch, hp), jnp.float32)
    c = jnp.zeros((batch, hp), jnp.float32)

    # seq_len is small and static -> fully unroll at trace time; h/c stay in
    # vregs, only the (B,HP) x (HP,4*HP) recurrent matmul is serialized.
    for t in range(seq_len):
        gates = gates_x[t * batch:(t + 1) * batch, :] + jnp.dot(
            h, whh, preferred_element_type=jnp.float32)          # (B, 4*HP)

        # PyTorch gate order i, f, g, o; each slice is a lane-aligned 128 block.
        i_g = jax.nn.sigmoid(gates[:, 0 * hp:1 * hp])
        f_g = jax.nn.sigmoid(gates[:, 1 * hp:2 * hp])
        g_g = jnp.tanh(gates[:, 2 * hp:3 * hp])
        o_g = jax.nn.sigmoid(gates[:, 3 * hp:4 * hp])

        # Padded lanes: gates==0 -> i=f=o=0.5, g=0 -> c_pad = 0.5*c_pad (stays 0),
        # h_pad = 0.5*tanh(0) = 0.  State padding never leaks.
        c = f_g * c + i_g * g_g
        h = o_g * jnp.tanh(c)

    # hidden[-1] -> dropout (identity, eval) -> folded dense1·dense2 -> log_softmax
    z = jnp.dot(h, w12, preferred_element_type=jnp.float32) + b12   # (B, CP)
    # Padded class lanes carry -1e30 bias -> exp underflows to 0 -> softmax
    # over the real C classes only.
    m = jnp.max(z, axis=1, keepdims=True)
    shifted = z - m
    lse = jnp.log(jnp.sum(jnp.exp(shifted), axis=1, keepdims=True))
    out_ref[...] = (shifted - lse).astype(out_ref.dtype)


def lstm_model_forward(x, params):
    """x: (B, T, D) float32 (batch-first, like PyTorch). Returns (B, C) log-probs."""
    B, T, D = x.shape
    HP = params["hidden_pad"]
    CP = params["classes_pad"]
    C = params["num_classes"]

    # (B,T,D) -> (T,B,D) -> (T*B, D): time-major so each step's rows are a
    # contiguous, sublane-aligned slab inside the kernel.
    x_flat = jnp.transpose(x, (1, 0, 2)).reshape(T * B, D)

    kernel = functools.partial(
        _lstm_model_kernel, seq_len=T, batch=B, d=D, hp=HP, cp=CP)
    vmem = pl.BlockSpec(memory_space=pltpu.MemorySpace.VMEM)

    out_padded = pl.pallas_call(
        kernel,
        in_specs=[vmem, vmem, vmem],
        out_specs=vmem,
        out_shape=jax.ShapeDtypeStruct((B, CP), jnp.float32),
    )(x_flat, params["w_all"], params["b_all"])
    return out_padded[:, :C]


def init_params(key, in_channels=128, hidden=50, num_classes=60,
                hidden_pad=128, classes_pad=128):
    ks = jax.random.split(key, 8)
    s = 0.1
    D, H, C = in_channels, hidden, num_classes
    HP, CP = hidden_pad, classes_pad
    DH = 32  # dense1 width (fixed by the module)

    # Raw parameters in PyTorch shapes.
    wih = jax.random.normal(ks[0], (4 * H, D), jnp.float32) * s   # (4H, D)
    whh = jax.random.normal(ks[1], (4 * H, H), jnp.float32) * s   # (4H, H)
    bih = jax.random.normal(ks[2], (4 * H,), jnp.float32) * s
    bhh = jax.random.normal(ks[3], (4 * H,), jnp.float32) * s
    w1 = jax.random.normal(ks[4], (DH, H), jnp.float32) * s       # (32, H)
    b1 = jax.random.normal(ks[5], (DH,), jnp.float32) * s
    w2 = jax.random.normal(ks[6], (C, DH), jnp.float32) * s       # (C, 32)
    b2 = jax.random.normal(ks[7], (C,), jnp.float32) * s

    b_lstm = bih + bhh

    def pad_gate_cols(w_t, rows_out):
        # w_t: (K, 4H) -> (rows_out, 4*HP); gate g's H real columns land at
        # [g*HP, g*HP+H), everything else (incl. padded rows) is zero.
        K = w_t.shape[0]
        out = jnp.zeros((rows_out, 4 * HP), jnp.float32)
        for g in range(4):
            out = out.at[:K, g * HP:g * HP + H].set(w_t[:, g * H:(g + 1) * H])
        return out

    wih_p = pad_gate_cols(wih.T, D)             # (D, 4*HP)
    whh_p = pad_gate_cols(whh.T, HP)            # (HP, 4*HP); rows >= H are zero
    b_p = pad_gate_cols(b_lstm[None, :], 1)     # (1, 4*HP)

    # Fold dense1 . dense2 (no nonlinearity between them; dropout is identity
    # in eval mode):  z = h @ (W1^T W2^T) + (b1 W2^T + b2)
    w12 = w1.T @ w2.T                           # (H, C)
    b12 = b1 @ w2.T + b2                        # (C,)
    w12_p = jnp.zeros((HP, CP), jnp.float32).at[:H, :C].set(w12)
    b12_p = jnp.full((CP,), _NEG, jnp.float32).at[:C].set(b12)

    # Pack everything the kernel needs into TWO contiguous DMA buffers.
    w_all = jnp.zeros((D + 2 * HP, 4 * HP), jnp.float32)
    w_all = w_all.at[:D, :].set(wih_p)
    w_all = w_all.at[D:D + HP, :].set(whh_p)
    w_all = w_all.at[D + HP:D + 2 * HP, :CP].set(w12_p)
    b_all = jnp.concatenate([b_p, b12_p[None, :]], axis=1)   # (1, 4*HP + CP)

    return {
        # Packed tensors consumed by the Pallas kernel.
        "w_all": w_all, "b_all": b_all,
        # Unpadded tensors for the pure-JAX reference.
        "wih_t": wih.T, "whh_t": whh.T, "b_lstm": b_lstm[None, :],
        "w1_t": w1.T, "b1": b1[None, :], "w2_t": w2.T, "b2": b2[None, :],
        # Static metadata.
        "hidden": H, "num_classes": C,
        "hidden_pad": HP, "classes_pad": CP,
    }


def reference_forward(x, params):
    """Pure-JAX reference reproducing the PyTorch forward (eval mode)."""
    B, T, D = x.shape
    H = params["hidden"]
    h = jnp.zeros((B, H), jnp.float32)
    c = jnp.zeros((B, H), jnp.float32)

    def step(carry, x_t):
        h, c = carry
        gates = x_t @ params["wih_t"] + h @ params["whh_t"] + params["b_lstm"]
        i = jax.nn.sigmoid(gates[:, 0 * H:1 * H])
        f = jax.nn.sigmoid(gates[:, 1 * H:2 * H])
        g = jnp.tanh(gates[:, 2 * H:3 * H])
        o = jax.nn.sigmoid(gates[:, 3 * H:4 * H])
        c = f * c + i * g
        h = o * jnp.tanh(c)
        return (h, c), None

    (h, _), _ = jax.lax.scan(step, (h, c), jnp.transpose(x, (1, 0, 2)))
    z1 = h @ params["w1_t"] + params["b1"]
    z2 = z1 @ params["w2_t"] + params["b2"]
    return jax.nn.log_softmax(z2, axis=1)


if __name__ == "__main__":
    B, T, D = 8, 8, 128          # batch, seq len, in_channels (module default)
    HIDDEN, NUM_CLASSES = 50, 60

    key = jax.random.PRNGKey(0)
    k_x, k_p = jax.random.split(key)
    x = jax.random.normal(k_x, (B, T, D), jnp.float32)
    params = init_params(k_p, in_channels=D, hidden=HIDDEN, num_classes=NUM_CLASSES)

    out = lstm_model_forward(x, params)
    out = jax.block_until_ready(out)

    ref = jax.block_until_ready(reference_forward(x, params))
    assert out.shape == (B, NUM_CLASSES)
    assert jnp.allclose(out, ref, atol=1e-4, rtol=1e-4), "mismatch vs reference"

    print("KERNEL_OK")
</pallas_src>

<mosaic_0001>
module attributes {stable_mosaic.version = 11 : i64} {
  func.func @_lstm_model_kernel(%arg0: memref<64x128xf32, #tpu.memory_space<vmem>>, %arg1: memref<384x512xf32, #tpu.memory_space<vmem>>, %arg2: memref<1x640xf32, #tpu.memory_space<vmem>>, %arg3: memref<8x128xf32, #tpu.memory_space<vmem>>) attributes {dimension_semantics = [], scalar_prefetch = 0 : i64, scratch_operands = 0 : i64, tpu.core_type = #tpu.core_type<tc>} {
    %c0 = arith.constant 0 : index
    %c0_0 = arith.constant 0 : index
    %0 = vector.load %arg1[%c0, %c0_0] : memref<384x512xf32, #tpu.memory_space<vmem>>, vector<128x512xf32>
    %c128 = arith.constant 128 : index
    %c0_1 = arith.constant 0 : index
    %1 = vector.load %arg1[%c128, %c0_1] : memref<384x512xf32, #tpu.memory_space<vmem>>, vector<128x512xf32>
    %c256 = arith.constant 256 : index
    %c0_2 = arith.constant 0 : index
    %2 = vector.load %arg1[%c256, %c0_2] : memref<384x512xf32, #tpu.memory_space<vmem>>, vector<128x128xf32>
    %c0_3 = arith.constant 0 : index
    %c0_4 = arith.constant 0 : index
    %3 = vector.load %arg2[%c0_3, %c0_4] : memref<1x640xf32, #tpu.memory_space<vmem>>, vector<1x512xf32>
    %c0_5 = arith.constant 0 : index
    %c512 = arith.constant 512 : index
    %4 = vector.load %arg2[%c0_5, %c512] : memref<1x640xf32, #tpu.memory_space<vmem>>, vector<1x128xf32>
    %c0_6 = arith.constant 0 : index
    %c0_7 = arith.constant 0 : index
    %5 = vector.load %arg0[%c0_6, %c0_7] : memref<64x128xf32, #tpu.memory_space<vmem>>, vector<64x128xf32>
    %cst = arith.constant dense<0.000000e+00> : vector<64x512xf32>
    %6 = tpu.matmul %5, %0, %cst {dimension_numbers = #tpu.dot_dimension_numbers<[1], [0], [0], [1], [0, 0, 1, 1], [], []>} : vector<64x128xf32>, vector<128x512xf32>, vector<64x512xf32> -> vector<64x512xf32>
    %7 = vector.broadcast %3 : vector<1x512xf32> to vector<64x512xf32>
    %8 = arith.addf %6, %7 : vector<64x512xf32>
    %cst_8 = arith.constant 0.000000e+00 : f32
    %9 = vector.broadcast %cst_8 : f32 to vector<8x128xf32>
    %cst_9 = arith.constant 0.000000e+00 : f32
    %10 = vector.broadcast %cst_9 : f32 to vector<8x128xf32>
    %11 = vector.extract_strided_slice %8 {offsets = [0, 0], sizes = [8, 512], strides = [1, 1]} : vector<64x512xf32> to vector<8x512xf32>
    %cst_10 = arith.constant dense<0.000000e+00> : vector<8x512xf32>
    %12 = tpu.matmul %9, %1, %cst_10 {dimension_numbers = #tpu.dot_dimension_numbers<[1], [0], [0], [1], [0, 0, 1, 1], [], []>} : vector<8x128xf32>, vector<128x512xf32>, vector<8x512xf32> -> vector<8x512xf32>
    %13 = arith.addf %11, %12 : vector<8x512xf32>
    %14 = vector.extract_strided_slice %13 {offsets = [0, 0], sizes = [8, 128], strides = [1, 1]} : vector<8x512xf32> to vector<8x128xf32>
    %15 = arith.negf %14 : vector<8x128xf32>
    %16 = math.exp %15 : vector<8x128xf32>
    %cst_11 = arith.constant 1.000000e+00 : f32
    %17 = vector.broadcast %cst_11 : f32 to vector<8x128xf32>
    %18 = arith.addf %17, %16 : vector<8x128xf32>
    %19 = arith.divf %17, %18 : vector<8x128xf32>
    %20 = vector.extract_strided_slice %13 {offsets = [0, 128], sizes = [8, 128], strides = [1, 1]} : vector<8x512xf32> to vector<8x128xf32>
    %21 = arith.negf %20 : vector<8x128xf32>
    %22 = math.exp %21 : vector<8x128xf32>
    %cst_12 = arith.constant 1.000000e+00 : f32
    %23 = vector.broadcast %cst_12 : f32 to vector<8x128xf32>
    %24 = arith.addf %23, %22 : vector<8x128xf32>
    %25 = arith.divf %23, %24 : vector<8x128xf32>
    %26 = vector.extract_strided_slice %13 {offsets = [0, 256], sizes = [8, 128], strides = [1, 1]} : vector<8x512xf32> to vector<8x128xf32>
    %27 = math.tanh %26 : vector<8x128xf32>
    %28 = vector.extract_strided_slice %13 {offsets = [0, 384], sizes = [8, 128], strides = [1, 1]} : vector<8x512xf32> to vector<8x128xf32>
    %29 = arith.negf %28 : vector<8x128xf32>
    %30 = math.exp %29 : vector<8x128xf32>
    %cst_13 = arith.constant 1.000000e+00 : f32
    %31 = vector.broadcast %cst_13 : f32 to vector<8x128xf32>
    %32 = arith.addf %31, %30 : vector<8x128xf32>
    %33 = arith.divf %31, %32 : vector<8x128xf32>
    %34 = arith.mulf %25, %10 : vector<8x128xf32>
    %35 = arith.mulf %19, %27 : vector<8x128xf32>
    %36 = arith.addf %34, %35 : vector<8x128xf32>
    %37 = math.tanh %36 : vector<8x128xf32>
    %38 = arith.mulf %33, %37 : vector<8x128xf32>
    %39 = vector.extract_strided_slice %8 {offsets = [8, 0], sizes = [8, 512], strides = [1, 1]} : vector<64x512xf32> to vector<8x512xf32>
    %cst_14 = arith.constant dense<0.000000e+00> : vector<8x512xf32>
    %40 = tpu.matmul %38, %1, %cst_14 {dimension_numbers = #tpu.dot_dimension_numbers<[1], [0], [0], [1], [0, 0, 1, 1], [], []>} : vector<8x128xf32>, vector<128x512xf32>, vector<8x512xf32> -> vector<8x512xf32>
    %41 = arith.addf %39, %40 : vector<8x512xf32>
    %42 = vector.extract_strided_slice %41 {offsets = [0, 0], sizes = [8, 128], strides = [1, 1]} : vector<8x512xf32> to vector<8x128xf32>
    %43 = arith.negf %42 : vector<8x128xf32>
    %44 = math.exp %43 : vector<8x128xf32>
    %cst_15 = arith.constant 1.000000e+00 : f32
    %45 = vector.broadcast %cst_15 : f32 to vector<8x128xf32>
    %46 = arith.addf %45, %44 : vector<8x128xf32>
    %47 = arith.divf %45, %46 : vector<8x128xf32>
    %48 = vector.extract_strided_slice %41 {offsets = [0, 128], sizes = [8, 128], strides = [1, 1]} : vector<8x512xf32> to vector<8x128xf32>
    %49 = arith.negf %48 : vector<8x128xf32>
    %50 = math.exp %49 : vector<8x128xf32>
    %cst_16 = arith.constant 1.000000e+00 : f32
    %51 = vector.broadcast %cst_16 : f32 to vector<8x128xf32>
    %52 = arith.addf %51, %50 : vector<8x128xf32>
    %53 = arith.divf %51, %52 : vector<8x128xf32>
    %54 = vector.extract_strided_slice %41 {offsets = [0, 256], sizes = [8, 128], strides = [1, 1]} : vector<8x512xf32> to vector<8x128xf32>
    %55 = math.tanh %54 : vector<8x128xf32>
    %56 = vector.extract_strided_slice %41 {offsets = [0, 384], sizes = [8, 128], strides = [1, 1]} : vector<8x512xf32> to vector<8x128xf32>
    %57 = arith.negf %56 : vector<8x128xf32>
    %58 = math.exp %57 : vector<8x128xf32>
    %cst_17 = arith.constant 1.000000e+00 : f32
    %59 = vector.broadcast %cst_17 : f32 to vector<8x128xf32>
    %60 = arith.addf %59, %58 : vector<8x128xf32>
    %61 = arith.divf %59, %60 : vector<8x128xf32>
    %62 = arith.mulf %53, %36 : vector<8x128xf32>
    %63 = arith.mulf %47, %55 : vector<8x128xf32>
    %64 = arith.addf %62, %63 : vector<8x128xf32>
    %65 = math.tanh %64 : vector<8x128xf32>
    %66 = arith.mulf %61, %65 : vector<8x128xf32>
    %67 = vector.extract_strided_slice %8 {offsets = [16, 0], sizes = [8, 512], strides = [1, 1]} : vector<64x512xf32> to vector<8x512xf32>
    %cst_18 = arith.constant dense<0.000000e+00> : vector<8x512xf32>
    %68 = tpu.matmul %66, %1, %cst_18 {dimension_numbers = #tpu.dot_dimension_numbers<[1], [0], [0], [1], [0, 0, 1, 1], [], []>} : vector<8x128xf32>, vector<128x512xf32>, vector<8x512xf32> -> vector<8x512xf32>
    %69 = arith.addf %67, %68 : vector<8x512xf32>
    %70 = vector.extract_strided_slice %69 {offsets = [0, 0], sizes = [8, 128], strides = [1, 1]} : vector<8x512xf32> to vector<8x128xf32>
    %71 = arith.negf %70 : vector<8x128xf32>
    %72 = math.exp %71 : vector<8x128xf32>
    %cst_19 = arith.constant 1.000000e+00 : f32
    %73 = vector.broadcast %cst_19 : f32 to vector<8x128xf32>
    %74 = arith.addf %73, %72 : vector<8x128xf32>
    %75 = arith.divf %73, %74 : vector<8x128xf32>
    %76 = vector.extract_strided_slice %69 {offsets = [0, 128], sizes = [8, 128], strides = [1, 1]} : vector<8x512xf32> to vector<8x128xf32>
    %77 = arith.negf %76 : vector<8x128xf32>
    %78 = math.exp %77 : vector<8x128xf32>
    %cst_20 = arith.constant 1.000000e+00 : f32
    %79 = vector.broadcast %cst_20 : f32 to vector<8x128xf32>
    %80 = arith.addf %79, %78 : vector<8x128xf32>
    %81 = arith.divf %79, %80 : vector<8x128xf32>
    %82 = vector.extract_strided_slice %69 {offsets = [0, 256], sizes = [8, 128], strides = [1, 1]} : vector<8x512xf32> to vector<8x128xf32>
    %83 = math.tanh %82 : vector<8x128xf32>
    %84 = vector.extract_strided_slice %69 {offsets = [0, 384], sizes = [8, 128], strides = [1, 1]} : vector<8x512xf32> to vector<8x128xf32>
    %85 = arith.negf %84 : vector<8x128xf32>
    %86 = math.exp %85 : vector<8x128xf32>
    %cst_21 = arith.constant 1.000000e+00 : f32
    %87 = vector.broadcast %cst_21 : f32 to vector<8x128xf32>
    %88 = arith.addf %87, %86 : vector<8x128xf32>
    %89 = arith.divf %87, %88 : vector<8x128xf32>
    %90 = arith.mulf %81, %64 : vector<8x128xf32>
    %91 = arith.mulf %75, %83 : vector<8x128xf32>
    %92 = arith.addf %90, %91 : vector<8x128xf32>
    %93 = math.tanh %92 : vector<8x128xf32>
    %94 = arith.mulf %89, %93 : vector<8x128xf32>
    %95 = vector.extract_strided_slice %8 {offsets = [24, 0], sizes = [8, 512], strides = [1, 1]} : vector<64x512xf32> to vector<8x512xf32>
    %cst_22 = arith.constant dense<0.000000e+00> : vector<8x512xf32>
    %96 = tpu.matmul %94, %1, %cst_22 {dimension_numbers = #tpu.dot_dimension_numbers<[1], [0], [0], [1], [0, 0, 1, 1], [], []>} : vector<8x128xf32>, vector<128x512xf32>, vector<8x512xf32> -> vector<8x512xf32>
    %97 = arith.addf %95, %96 : vector<8x512xf32>
    %98 = vector.extract_strided_slice %97 {offsets = [0, 0], sizes = [8, 128], strides = [1, 1]} : vector<8x512xf32> to vector<8x128xf32>
    %99 = arith.negf %98 : vector<8x128xf32>
    %100 = math.exp %99 : vector<8x128xf32>
    %cst_23 = arith.constant 1.000000e+00 : f32
    %101 = vector.broadcast %cst_23 : f32 to vector<8x128xf32>
    %102 = arith.addf %101, %100 : vector<8x128xf32>
    %103 = arith.divf %101, %102 : vector<8x128xf32>
    %104 = vector.extract_strided_slice %97 {offsets = [0, 128], sizes = [8, 128], strides = [1, 1]} : vector<8x512xf32> to vector<8x128xf32>
    %105 = arith.negf %104 : vector<8x128xf32>
    %106 = math.exp %105 : vector<8x128xf32>
    %cst_24 = arith.constant 1.000000e+00 : f32
    %107 = vector.broadcast %cst_24 : f32 to vector<8x128xf32>
    %108 = arith.addf %107, %106 : vector<8x128xf32>
    %109 = arith.divf %107, %108 : vector<8x128xf32>
    %110 = vector.extract_strided_slice %97 {offsets = [0, 256], sizes = [8, 128], strides = [1, 1]} : vector<8x512xf32> to vector<8x128xf32>
    %111 = math.tanh %110 : vector<8x128xf32>
    %112 = vector.extract_strided_slice %97 {offsets = [0, 384], sizes = [8, 128], strides = [1, 1]} : vector<8x512xf32> to vector<8x128xf32>
    %113 = arith.negf %112 : vector<8x128xf32>
    %114 = math.exp %113 : vector<8x128xf32>
    %cst_25 = arith.constant 1.000000e+00 : f32
    %115 = vector.broadcast %cst_25 : f32 to vector<8x128xf32>
    %116 = arith.addf %115, %114 : vector<8x128xf32>
    %117 = arith.divf %115, %116 : vector<8x128xf32>
    %118 = arith.mulf %109, %92 : vector<8x128xf32>
    %119 = arith.mulf %103, %111 : vector<8x128xf32>
    %120 = arith.addf %118, %119 : vector<8x128xf32>
    %121 = math.tanh %120 : vector<8x128xf32>
    %122 = arith.mulf %117, %121 : vector<8x128xf32>
    %123 = vector.extract_strided_slice %8 {offsets = [32, 0], sizes = [8, 512], strides = [1, 1]} : vector<64x512xf32> to vector<8x512xf32>
    %cst_26 = arith.constant dense<0.000000e+00> : vector<8x512xf32>
    %124 = tpu.matmul %122, %1, %cst_26 {dimension_numbers = #tpu.dot_dimension_numbers<[1], [0], [0], [1], [0, 0, 1, 1], [], []>} : vector<8x128xf32>, vector<128x512xf32>, vector<8x512xf32> -> vector<8x512xf32>
    %125 = arith.addf %123, %124 : vector<8x512xf32>
    %126 = vector.extract_strided_slice %125 {offsets = [0, 0], sizes = [8, 128], strides = [1, 1]} : vector<8x512xf32> to vector<8x128xf32>
    %127 = arith.negf %126 : vector<8x128xf32>
    %128 = math.exp %127 : vector<8x128xf32>
    %cst_27 = arith.constant 1.000000e+00 : f32
    %129 = vector.broadcast %cst_27 : f32 to vector<8x128xf32>
    %130 = arith.addf %129, %128 : vector<8x128xf32>
    %131 = arith.divf %129, %130 : vector<8x128xf32>
    %132 = vector.extract_strided_slice %125 {offsets = [0, 128], sizes = [8, 128], strides = [1, 1]} : vector<8x512xf32> to vector<8x128xf32>
    %133 = arith.negf %132 : vector<8x128xf32>
    %134 = math.exp %133 : vector<8x128xf32>
    %cst_28 = arith.constant 1.000000e+00 : f32
    %135 = vector.broadcast %cst_28 : f32 to vector<8x128xf32>
    %136 = arith.addf %135, %134 : vector<8x128xf32>
    %137 = arith.divf %135, %136 : vector<8x128xf32>
    %138 = vector.extract_strided_slice %125 {offsets = [0, 256], sizes = [8, 128], strides = [1, 1]} : vector<8x512xf32> to vector<8x128xf32>
    %139 = math.tanh %138 : vector<8x128xf32>
    %140 = vector.extract_strided_slice %125 {offsets = [0, 384], sizes = [8, 128], strides = [1, 1]} : vector<8x512xf32> to vector<8x128xf32>
    %141 = arith.negf %140 : vector<8x128xf32>
    %142 = math.exp %141 : vector<8x128xf32>
    %cst_29 = arith.constant 1.000000e+00 : f32
    %143 = vector.broadcast %cst_29 : f32 to vector<8x128xf32>
    %144 = arith.addf %143, %142 : vector<8x128xf32>
    %145 = arith.divf %143, %144 : vector<8x128xf32>
    %146 = arith.mulf %137, %120 : vector<8x128xf32>
    %147 = arith.mulf %131, %139 : vector<8x128xf32>
    %148 = arith.addf %146, %147 : vector<8x128xf32>
    %149 = math.tanh %148 : vector<8x128xf32>
    %150 = arith.mulf %145, %149 : vector<8x128xf32>
    %151 = vector.extract_strided_slice %8 {offsets = [40, 0], sizes = [8, 512], strides = [1, 1]} : vector<64x512xf32> to vector<8x512xf32>
    %cst_30 = arith.constant dense<0.000000e+00> : vector<8x512xf32>
    %152 = tpu.matmul %150, %1, %cst_30 {dimension_numbers = #tpu.dot_dimension_numbers<[1], [0], [0], [1], [0, 0, 1, 1], [], []>} : vector<8x128xf32>, vector<128x512xf32>, vector<8x512xf32> -> vector<8x512xf32>
    %153 = arith.addf %151, %152 : vector<8x512xf32>
    %154 = vector.extract_strided_slice %153 {offsets = [0, 0], sizes = [8, 128], strides = [1, 1]} : vector<8x512xf32> to vector<8x128xf32>
    %155 = arith.negf %154 : vector<8x128xf32>
    %156 = math.exp %155 : vector<8x128xf32>
    %cst_31 = arith.constant 1.000000e+00 : f32
    %157 = vector.broadcast %cst_31 : f32 to vector<8x128xf32>
    %158 = arith.addf %157, %156 : vector<8x128xf32>
    %159 = arith.divf %157, %158 : vector<8x128xf32>
    %160 = vector.extract_strided_slice %153 {offsets = [0, 128], sizes = [8, 128], strides = [1, 1]} : vector<8x512xf32> to vector<8x128xf32>
    %161 = arith.negf %160 : vector<8x128xf32>
    %162 = math.exp %161 : vector<8x128xf32>
    %cst_32 = arith.constant 1.000000e+00 : f32
    %163 = vector.broadcast %cst_32 : f32 to vector<8x128xf32>
    %164 = arith.addf %163, %162 : vector<8x128xf32>
    %165 = arith.divf %163, %164 : vector<8x128xf32>
    %166 = vector.extract_strided_slice %153 {offsets = [0, 256], sizes = [8, 128], strides = [1, 1]} : vector<8x512xf32> to vector<8x128xf32>
    %167 = math.tanh %166 : vector<8x128xf32>
    %168 = vector.extract_strided_slice %153 {offsets = [0, 384], sizes = [8, 128], strides = [1, 1]} : vector<8x512xf32> to vector<8x128xf32>
    %169 = arith.negf %168 : vector<8x128xf32>
    %170 = math.exp %169 : vector<8x128xf32>
    %cst_33 = arith.constant 1.000000e+00 : f32
    %171 = vector.broadcast %cst_33 : f32 to vector<8x128xf32>
    %172 = arith.addf %171, %170 : vector<8x128xf32>
    %173 = arith.divf %171, %172 : vector<8x128xf32>
    %174 = arith.mulf %165, %148 : vector<8x128xf32>
    %175 = arith.mulf %159, %167 : vector<8x128xf32>
    %176 = arith.addf %174, %175 : vector<8x128xf32>
    %177 = math.tanh %176 : vector<8x128xf32>
    %178 = arith.mulf %173, %177 : vector<8x128xf32>
    %179 = vector.extract_strided_slice %8 {offsets = [48, 0], sizes = [8, 512], strides = [1, 1]} : vector<64x512xf32> to vector<8x512xf32>
    %cst_34 = arith.constant dense<0.000000e+00> : vector<8x512xf32>
    %180 = tpu.matmul %178, %1, %cst_34 {dimension_numbers = #tpu.dot_dimension_numbers<[1], [0], [0], [1], [0, 0, 1, 1], [], []>} : vector<8x128xf32>, vector<128x512xf32>, vector<8x512xf32> -> vector<8x512xf32>
    %181 = arith.addf %179, %180 : vector<8x512xf32>
    %182 = vector.extract_strided_slice %181 {offsets = [0, 0], sizes = [8, 128], strides = [1, 1]} : vector<8x512xf32> to vector<8x128xf32>
    %183 = arith.negf %182 : vector<8x128xf32>
    %184 = math.exp %183 : vector<8x128xf32>
    %cst_35 = arith.constant 1.000000e+00 : f32
    %185 = vector.broadcast %cst_35 : f32 to vector<8x128xf32>
    %186 = arith.addf %185, %184 : vector<8x128xf32>
    %187 = arith.divf %185, %186 : vector<8x128xf32>
    %188 = vector.extract_strided_slice %181 {offsets = [0, 128], sizes = [8, 128], strides = [1, 1]} : vector<8x512xf32> to vector<8x128xf32>
    %189 = arith.negf %188 : vector<8x128xf32>
    %190 = math.exp %189 : vector<8x128xf32>
    %cst_36 = arith.constant 1.000000e+00 : f32
    %191 = vector.broadcast %cst_36 : f32 to vector<8x128xf32>
    %192 = arith.addf %191, %190 : vector<8x128xf32>
    %193 = arith.divf %191, %192 : vector<8x128xf32>
    %194 = vector.extract_strided_slice %181 {offsets = [0, 256], sizes = [8, 128], strides = [1, 1]} : vector<8x512xf32> to vector<8x128xf32>
    %195 = math.tanh %194 : vector<8x128xf32>
    %196 = vector.extract_strided_slice %181 {offsets = [0, 384], sizes = [8, 128], strides = [1, 1]} : vector<8x512xf32> to vector<8x128xf32>
    %197 = arith.negf %196 : vector<8x128xf32>
    %198 = math.exp %197 : vector<8x128xf32>
    %cst_37 = arith.constant 1.000000e+00 : f32
    %199 = vector.broadcast %cst_37 : f32 to vector<8x128xf32>
    %200 = arith.addf %199, %198 : vector<8x128xf32>
    %201 = arith.divf %199, %200 : vector<8x128xf32>
    %202 = arith.mulf %193, %176 : vector<8x128xf32>
    %203 = arith.mulf %187, %195 : vector<8x128xf32>
    %204 = arith.addf %202, %203 : vector<8x128xf32>
    %205 = math.tanh %204 : vector<8x128xf32>
    %206 = arith.mulf %201, %205 : vector<8x128xf32>
    %207 = vector.extract_strided_slice %8 {offsets = [56, 0], sizes = [8, 512], strides = [1, 1]} : vector<64x512xf32> to vector<8x512xf32>
    %cst_38 = arith.constant dense<0.000000e+00> : vector<8x512xf32>
    %208 = tpu.matmul %206, %1, %cst_38 {dimension_numbers = #tpu.dot_dimension_numbers<[1], [0], [0], [1], [0, 0, 1, 1], [], []>} : vector<8x128xf32>, vector<128x512xf32>, vector<8x512xf32> -> vector<8x512xf32>
    %209 = arith.addf %207, %208 : vector<8x512xf32>
    %210 = vector.extract_strided_slice %209 {offsets = [0, 0], sizes = [8, 128], strides = [1, 1]} : vector<8x512xf32> to vector<8x128xf32>
    %211 = arith.negf %210 : vector<8x128xf32>
    %212 = math.exp %211 : vector<8x128xf32>
    %cst_39 = arith.constant 1.000000e+00 : f32
    %213 = vector.broadcast %cst_39 : f32 to vector<8x128xf32>
    %214 = arith.addf %213, %212 : vector<8x128xf32>
    %215 = arith.divf %213, %214 : vector<8x128xf32>
    %216 = vector.extract_strided_slice %209 {offsets = [0, 128], sizes = [8, 128], strides = [1, 1]} : vector<8x512xf32> to vector<8x128xf32>
    %217 = arith.negf %216 : vector<8x128xf32>
    %218 = math.exp %217 : vector<8x128xf32>
    %cst_40 = arith.constant 1.000000e+00 : f32
    %219 = vector.broadcast %cst_40 : f32 to vector<8x128xf32>
    %220 = arith.addf %219, %218 : vector<8x128xf32>
    %221 = arith.divf %219, %220 : vector<8x128xf32>
    %222 = vector.extract_strided_slice %209 {offsets = [0, 256], sizes = [8, 128], strides = [1, 1]} : vector<8x512xf32> to vector<8x128xf32>
    %223 = math.tanh %222 : vector<8x128xf32>
    %224 = vector.extract_strided_slice %209 {offsets = [0, 384], sizes = [8, 128], strides = [1, 1]} : vector<8x512xf32> to vector<8x128xf32>
    %225 = arith.negf %224 : vector<8x128xf32>
    %226 = math.exp %225 : vector<8x128xf32>
    %cst_41 = arith.constant 1.000000e+00 : f32
    %227 = vector.broadcast %cst_41 : f32 to vector<8x128xf32>
    %228 = arith.addf %227, %226 : vector<8x128xf32>
    %229 = arith.divf %227, %228 : vector<8x128xf32>
    %230 = arith.mulf %221, %204 : vector<8x128xf32>
    %231 = arith.mulf %215, %223 : vector<8x128xf32>
    %232 = arith.addf %230, %231 : vector<8x128xf32>
    %233 = math.tanh %232 : vector<8x128xf32>
    %234 = arith.mulf %229, %233 : vector<8x128xf32>
    %cst_42 = arith.constant dense<0.000000e+00> : vector<8x128xf32>
    %235 = tpu.matmul %234, %2, %cst_42 {dimension_numbers = #tpu.dot_dimension_numbers<[1], [0], [0], [1], [0, 0, 1, 1], [], []>} : vector<8x128xf32>, vector<128x128xf32>, vector<8x128xf32> -> vector<8x128xf32>
    %236 = vector.broadcast %4 : vector<1x128xf32> to vector<8x128xf32>
    %237 = arith.addf %235, %236 : vector<8x128xf32>
    %cst_43 = arith.constant dense<0xFF800000> : vector<8xf32>
    %238 = vector.multi_reduction <maximumf>, %237, %cst_43 [1] : vector<8x128xf32> to vector<8xf32>
    %239 = vector.shape_cast %238 : vector<8xf32> to vector<8x1xf32>
    %240 = vector.broadcast %239 : vector<8x1xf32> to vector<8x128xf32>
    %241 = arith.subf %237, %240 : vector<8x128xf32>
    %242 = math.exp %241 : vector<8x128xf32>
    %cst_44 = arith.constant dense<0.000000e+00> : vector<8xf32>
    %243 = vector.multi_reduction <add>, %242, %cst_44 [1] : vector<8x128xf32> to vector<8xf32>
    %244 = vector.shape_cast %243 : vector<8xf32> to vector<8x1xf32>
    %245 = math.log %244 : vector<8x1xf32>
    %246 = vector.broadcast %245 : vector<8x1xf32> to vector<8x128xf32>
    %247 = arith.subf %241, %246 : vector<8x128xf32>
    %c0_45 = arith.constant 0 : index
    %c0_46 = arith.constant 0 : index
    %248 = vector.load %arg3[%c0_45, %c0_46] : memref<8x128xf32, #tpu.memory_space<vmem>>, vector<8x128xf32>
    tpu.vector_store %arg3[%c0_45, %c0_46], %247 {strides = array<i32>} : memref<8x128xf32, #tpu.memory_space<vmem>>, vector<8x128xf32>,
    return
  }
}

</mosaic_0001>

<llo_original>
// kernel: tpu_custom_call.1
$region0: #{tpu_custom_call.1}
  #allocation0 [shape = 'u32[]', space=smem, size = 0x4, offset = 0x4, fixed_abs, tag = 'smem constant byte address 0x4 - core index']
  #allocation1 [shape = 'u32[144,128]{1,0:T(1,128)}', space=vmem, size = 0x12000, scoped, tag = 'internal scratch']
  %s0 = inlined_call_operand.hbm [shape: f32[64,128], index: 0, kind: input, shape index: {}]
  %s1 = inlined_call_operand.hbm [shape: f32[384,512], index: 1, kind: input, shape index: {}]
  %s2 = inlined_call_operand.hbm [shape: f32[1,640], index: 2, kind: input, shape index: {}]
  %s3 = inlined_call_operand.hbm [shape: f32[8,128], index: 3, kind: output, shape index: {}]
  %s4 = sld [smem:[#allocation0]]
  $region34: #{tpu_custom_call.1} parent=0
    _
  %s6 = ssub.s32 1, %s4
  %s7 = scalar_select 0, %s6, %s4
  $region1: #{tpu_custom_call.1} parent=0
    #allocation2 [shape = 'u8[32768]{0}', space=vmem, size = 0x8000, scoped, tag = 'input window, operand 0, single buffered']
    #allocation3 [shape = 's32[1]{0}', space=sflag, size = 0x4, scoped, tag = 'scoped memory for tpu_custom_call.1']
    #allocation4 [shape = 's32[1]{0}', space=sflag, size = 0x4, scoped, tag = 'scoped memory for tpu_custom_call.1']
    #allocation5 [shape = 'u8[786432]{0}', space=vmem, size = 0xc0000, scoped, tag = 'input window, operand 1, single buffered']
    #allocation6 [shape = 's32[1]{0}', space=sflag, size = 0x4, scoped, tag = 'scoped memory for tpu_custom_call.1']
    #allocation7 [shape = 'u8[2560]{0}', space=vmem, size = 0xc00, scoped, tag = 'input window, operand 2, single buffered']
    #allocation8 [shape = 'u8[4096]{0}', space=vmem, size = 0x1000, scoped, tag = 'output window, operand 0, single buffered']
    %8 = vsyncpa [#allocation3], 0
    %9 = vsyncpa [#allocation6], 0
    %10 = vsyncpa [#allocation4], 0
    // Predicated region
    $region2: #{tpu_custom_call.1} parent=1 // pred_check
      _
    $region3: #{tpu_custom_call.1} parent=1 // pred_check_branch
      %12 = sbr.rel (0) target = $region5
    $region4: #{tpu_custom_call.1} parent=1 // pred_region
      %s14 = ssub.s32 1024, 1024
      %15 = vsyncadd [#allocation3], %s14
      %s16 = sshll.u32 [#allocation2], 4
      %s17 = int_to_ptr.vmem [resolvable:$true] %s16
      %22 = dma.hbm_to_vmem [thread:$0]  %s0, 1024, %s17, [#allocation3], 128, 128, 8
    $region5: #{tpu_custom_call.1} parent=1 // pred_fallthru
      _
    // Predicated region
    $region6: #{tpu_custom_call.1} parent=1 // pred_check
      _
    $region7: #{tpu_custom_call.1} parent=1 // pred_check_branch
      %24 = sbr.rel (0) target = $region9
    $region8: #{tpu_custom_call.1} parent=1 // pred_region
      %s26 = ssub.s32 24576, 24576
      %27 = vsyncadd [#allocation6], %s26
      %s28 = sshll.u32 [#allocation5], 4
      %s29 = int_to_ptr.vmem [resolvable:$true] %s28
      %34 = dma.hbm_to_vmem [thread:$0]  %s1, 24576, %s29, [#allocation6], 512, 512, 32
    $region9: #{tpu_custom_call.1} parent=1 // pred_fallthru
      _
    // Predicated region
    $region10: #{tpu_custom_call.1} parent=1 // pred_check
      _
    $region11: #{tpu_custom_call.1} parent=1 // pred_check_branch
      %36 = sbr.rel (0) target = $region13
    $region12: #{tpu_custom_call.1} parent=1 // pred_region
      %s38 = ssub.s32 80, 80
      %39 = vsyncadd [#allocation6], %s38
      %s41 = sshll.u32 [#allocation7], 4
      %s42 = int_to_ptr.vmem [resolvable:$true] %s41
      %44 = dma.hbm_to_vmem [thread:$0]  %s2, 80, %s42, [#allocation6]
    $region13: #{tpu_custom_call.1} parent=1 // pred_fallthru
      _
    // Predicated region
    $region14: #{tpu_custom_call.1} parent=1 // pred_check
      _
    $region15: #{tpu_custom_call.1} parent=1 // pred_check_branch
      %46 = sbr.rel (0) target = $region17
    $region16: #{tpu_custom_call.1} parent=1 // pred_region
      %47 = dma.done [#allocation3], 1024
    $region17: #{tpu_custom_call.1} parent=1 // pred_fallthru
      _
    // Predicated region
    $region18: #{tpu_custom_call.1} parent=1 // pred_check
      _
    $region19: #{tpu_custom_call.1} parent=1 // pred_check_branch
      %49 = sbr.rel (0) target = $region21
    $region20: #{tpu_custom_call.1} parent=1 // pred_region
      %50 = dma.done [#allocation6], 24576
    $region21: #{tpu_custom_call.1} parent=1 // pred_fallthru
      _
    // Predicated region
    $region22: #{tpu_custom_call.1} parent=1 // pred_check
      _
    $region23: #{tpu_custom_call.1} parent=1 // pred_check_branch
      %52 = sbr.rel (0) target = $region25
    $region24: #{tpu_custom_call.1} parent=1 // pred_region
      %53 = dma.done [#allocation6], 80
    $region25: #{tpu_custom_call.1} parent=1 // pred_fallthru
      _
    %v54 = vld [vmem:[#allocation5] sm:$0xff]
    %v55 = vld [vmem:[#allocation5 + $0x8] sm:$0xff]
    %v56 = vld [vmem:[#allocation5 + $0x10] sm:$0xff]
    %v57 = vld [vmem:[#allocation5 + $0x18] sm:$0xff]
    %v58 = vld [vmem:[#allocation5 + $0x20] sm:$0xff]
    %v59 = vld [vmem:[#allocation5 + $0x28] sm:$0xff]
    %v60 = vld [vmem:[#allocation5 + $0x30] sm:$0xff]
    %v61 = vld [vmem:[#allocation5 + $0x38] sm:$0xff]
    %v62 = vld [vmem:[#allocation5 + $0x40] sm:$0xff]
    %v63 = vld [vmem:[#allocation5 + $0x48] sm:$0xff]
    %v64 = vld [vmem:[#allocation5 + $0x50] sm:$0xff]
    %v65 = vld [vmem:[#allocation5 + $0x58] sm:$0xff]
    %v66 = vld [vmem:[#allocation5 + $0x60] sm:$0xff]
    %v67 = vld [vmem:[#allocation5 + $0x68] sm:$0xff]
    %v68 = vld [vmem:[#allocation5 + $0x70] sm:$0xff]
    %v69 = vld [vmem:[#allocation5 + $0x78] sm:$0xff]
    %v70 = vld [vmem:[#allocation5 + $0x80] sm:$0xff]
    %v71 = vld [vmem:[#allocation5 + $0x88] sm:$0xff]
    %v72 = vld [vmem:[#allocation5 + $0x90] sm:$0xff]
    %v73 = vld [vmem:[#allocation5 + $0x98] sm:$0xff]
    %v74 = vld [vmem:[#allocation5 + $0xa0] sm:$0xff]
    %v75 = vld [vmem:[#allocation5 + $0xa8] sm:$0xff]
    %v76 = vld [vmem:[#allocation5 + $0xb0] sm:$0xff]
    %v77 = vld [vmem:[#allocation5 + $0xb8] sm:$0xff]
    %v78 = vld [vmem:[#allocation5 + $0xc0] sm:$0xff]
    %v79 = vld [vmem:[#allocation5 + $0xc8] sm:$0xff]
    %v80 = vld [vmem:[#allocation5 + $0xd0] sm:$0xff]
    %v81 = vld [vmem:[#allocation5 + $0xd8] sm:$0xff]
    %v82 = vld [vmem:[#allocation5 + $0xe0] sm:$0xff]
    %v83 = vld [vmem:[#allocation5 + $0xe8] sm:$0xff]
    %v84 = vld [vmem:[#allocation5 + $0xf0] sm:$0xff]
    %v85 = vld [vmem:[#allocation5 + $0xf8] sm:$0xff]
    %v86 = vld [vmem:[#allocation5 + $0x100] sm:$0xff]
    %v87 = vld [vmem:[#allocation5 + $0x108] sm:$0xff]
    %v88 = vld [vmem:[#allocation5 + $0x110] sm:$0xff]
    %v89 = vld [vmem:[#allocation5 + $0x118] sm:$0xff]
    %v90 = vld [vmem:[#allocation5 + $0x120] sm:$0xff]
    %v91 = vld [vmem:[#allocation5 + $0x128] sm:$0xff]
    %v92 = vld [vmem:[#allocation5 + $0x130] sm:$0xff]
    %v93 = vld [vmem:[#allocation5 + $0x138] sm:$0xff]
    %v94 = vld [vmem:[#allocation5 + $0x140] sm:$0xff]
    %v95 = vld [vmem:[#allocation5 + $0x148] sm:$0xff]
    %v96 = vld [vmem:[#allocation5 + $0x150] sm:$0xff]
    %v97 = vld [vmem:[#allocation5 + $0x158] sm:$0xff]
    %v98 = vld [vmem:[#allocation5 + $0x160] sm:$0xff]
    %v99 = vld [vmem:[#allocation5 + $0x168] sm:$0xff]
    %v100 = vld [vmem:[#allocation5 + $0x170] sm:$0xff]
    %v101 = vld [vmem:[#allocation5 + $0x178] sm:$0xff]
    %v102 = vld [vmem:[#allocation5 + $0x180] sm:$0xff]
    %v103 = vld [vmem:[#allocation5 + $0x188] sm:$0xff]
    %v104 = vld [vmem:[#allocation5 + $0x190] sm:$0xff]
    %v105 = vld [vmem:[#allocation5 + $0x198] sm:$0xff]
    %v106 = vld [vmem:[#allocation5 + $0x1a0] sm:$0xff]
    %v107 = vld [vmem:[#allocation5 + $0x1a8] sm:$0xff]
    %v108 = vld [vmem:[#allocation5 + $0x1b0] sm:$0xff]
    %v109 = vld [vmem:[#allocation5 + $0x1b8] sm:$0xff]
    %v110 = vld [vmem:[#allocation5 + $0x1c0] sm:$0xff]
    %v111 = vld [vmem:[#allocation5 + $0x1c8] sm:$0xff]
    %v112 = vld [vmem:[#allocation5 + $0x1d0] sm:$0xff]
    %v113 = vld [vmem:[#allocation5 + $0x1d8] sm:$0xff]
    %v114 = vld [vmem:[#allocation5 + $0x1e0] sm:$0xff]
    %v115 = vld [vmem:[#allocation5 + $0x1e8] sm:$0xff]
    %v116 = vld [vmem:[#allocation5 + $0x1f0] sm:$0xff]
    %v117 = vld [vmem:[#allocation5 + $0x1f8] sm:$0xff]
    %v118 = vld [vmem:[#allocation5 + $0x200] sm:$0xff]
    %v119 = vld [vmem:[#allocation5 + $0x208] sm:$0xff]
    %v120 = vld [vmem:[#allocation5 + $0x210] sm:$0xff]
    %v121 = vld [vmem:[#allocation5 + $0x218] sm:$0xff]
    %v122 = vld [vmem:[#allocation5 + $0x220] sm:$0xff]
    %v123 = vld [vmem:[#allocation5 + $0x228] sm:$0xff]
    %v124 = vld [vmem:[#allocation5 + $0x230] sm:$0xff]
    %v125 = vld [vmem:[#allocation5 + $0x238] sm:$0xff]
    %v126 = vld [vmem:[#allocation5 + $0x240] sm:$0xff]
    %v127 = vld [vmem:[#allocation5 + $0x248] sm:$0xff]
    %v128 = vld [vmem:[#allocation5 + $0x250] sm:$0xff]
    %v129 = vld [vmem:[#allocation5 + $0x258] sm:$0xff]
    %v130 = vld [vmem:[#allocation5 + $0x260] sm:$0xff]
    %v131 = vld [vmem:[#allocation5 + $0x268] sm:$0xff]
    %v132 = vld [vmem:[#allocation5 + $0x270] sm:$0xff]
    %v133 = vld [vmem:[#allocation5 + $0x278] sm:$0xff]
    %v134 = vld [vmem:[#allocation5 + $0x280] sm:$0xff]
    %v135 = vld [vmem:[#allocation5 + $0x288] sm:$0xff]
    %v136 = vld [vmem:[#allocation5 + $0x290] sm:$0xff]
    %v137 = vld [vmem:[#allocation5 + $0x298] sm:$0xff]
    %v138 = vld [vmem:[#allocation5 + $0x2a0] sm:$0xff]
    %v139 = vld [vmem:[#allocation5 + $0x2a8] sm:$0xff]
    %v140 = vld [vmem:[#allocation5 + $0x2b0] sm:$0xff]
    %v141 = vld [vmem:[#allocation5 + $0x2b8] sm:$0xff]
    %v142 = vld [vmem:[#allocation5 + $0x2c0] sm:$0xff]
    %v143 = vld [vmem:[#allocation5 + $0x2c8] sm:$0xff]
    %v144 = vld [vmem:[#allocation5 + $0x2d0] sm:$0xff]
    %v145 = vld [vmem:[#allocation5 + $0x2d8] sm:$0xff]
    %v146 = vld [vmem:[#allocation5 + $0x2e0] sm:$0xff]
    %v147 = vld [vmem:[#allocation5 + $0x2e8] sm:$0xff]
    %v148 = vld [vmem:[#allocation5 + $0x2f0] sm:$0xff]
    %v149 = vld [vmem:[#allocation5 + $0x2f8] sm:$0xff]
    %v150 = vld [vmem:[#allocation5 + $0x300] sm:$0xff]
    %v151 = vld [vmem:[#allocation5 + $0x308] sm:$0xff]
    %v152 = vld [vmem:[#allocation5 + $0x310] sm:$0xff]
    %v153 = vld [vmem:[#allocation5 + $0x318] sm:$0xff]
    %v154 = vld [vmem:[#allocation5 + $0x320] sm:$0xff]
    %v155 = vld [vmem:[#allocation5 + $0x328] sm:$0xff]
    %v156 = vld [vmem:[#allocation5 + $0x330] sm:$0xff]
    %v157 = vld [vmem:[#allocation5 + $0x338] sm:$0xff]
    %v158 = vld [vmem:[#allocation5 + $0x340] sm:$0xff]
    %v159 = vld [vmem:[#allocation5 + $0x348] sm:$0xff]
    %v160 = vld [vmem:[#allocation5 + $0x350] sm:$0xff]
    %v161 = vld [vmem:[#allocation5 + $0x358] sm:$0xff]
    %v162 = vld [vmem:[#allocation5 + $0x360] sm:$0xff]
    %v163 = vld [vmem:[#allocation5 + $0x368] sm:$0xff]
    %v164 = vld [vmem:[#allocation5 + $0x370] sm:$0xff]
    %v165 = vld [vmem:[#allocation5 + $0x378] sm:$0xff]
    %v166 = vld [vmem:[#allocation5 + $0x380] sm:$0xff]
    %v167 = vld [vmem:[#allocation5 + $0x388] sm:$0xff]
    %v168 = vld [vmem:[#allocation5 + $0x390] sm:$0xff]
    %v169 = vld [vmem:[#allocation5 + $0x398] sm:$0xff]
    %v170 = vld [vmem:[#allocation5 + $0x3a0] sm:$0xff]
    %v171 = vld [vmem:[#allocation5 + $0x3a8] sm:$0xff]
    %v172 = vld [vmem:[#allocation5 + $0x3b0] sm:$0xff]
    %v173 = vld [vmem:[#allocation5 + $0x3b8] sm:$0xff]
    %v174 = vld [vmem:[#allocation5 + $0x3c0] sm:$0xff]
    %v175 = vld [vmem:[#allocation5 + $0x3c8] sm:$0xff]
    %v176 = vld [vmem:[#allocation5 + $0x3d0] sm:$0xff]
    %v177 = vld [vmem:[#allocation5 + $0x3d8] sm:$0xff]
    %v178 = vld [vmem:[#allocation5 + $0x3e0] sm:$0xff]
    %v179 = vld [vmem:[#allocation5 + $0x3e8] sm:$0xff]
    %v180 = vld [vmem:[#allocation5 + $0x3f0] sm:$0xff]
    %v181 = vld [vmem:[#allocation5 + $0x3f8] sm:$0xff]
    %v182 = vld [vmem:[#allocation5 + $0x400] sm:$0xff]
    %v183 = vld [vmem:[#allocation5 + $0x420] sm:$0xff]
    %v184 = vld [vmem:[#allocation5 + $0x440] sm:$0xff]
    %v185 = vld [vmem:[#allocation5 + $0x460] sm:$0xff]
    %v186 = vld [vmem:[#allocation5 + $0x480] sm:$0xff]
    %v187 = vld [vmem:[#allocation5 + $0x4a0] sm:$0xff]
    %v188 = vld [vmem:[#allocation5 + $0x4c0] sm:$0xff]
    %v189 = vld [vmem:[#allocation5 + $0x4e0] sm:$0xff]
    %v190 = vld [vmem:[#allocation5 + $0x500] sm:$0xff]
    %v191 = vld [vmem:[#allocation5 + $0x520] sm:$0xff]
    %v192 = vld [vmem:[#allocation5 + $0x540] sm:$0xff]
    %v193 = vld [vmem:[#allocation5 + $0x560] sm:$0xff]
    %v194 = vld [vmem:[#allocation5 + $0x580] sm:$0xff]
    %v195 = vld [vmem:[#allocation5 + $0x5a0] sm:$0xff]
    %v196 = vld [vmem:[#allocation5 + $0x5c0] sm:$0xff]
    %v197 = vld [vmem:[#allocation5 + $0x5e0] sm:$0xff]
    %v198 = vld [vmem:[#allocation7] sm:$0xf]
    %v199 = vld [vmem:[#allocation7 + $0x4] sm:$0x1]
    %v200 = vld [vmem:[#allocation2] sm:$0xff]
    %v201 = vld [vmem:[#allocation2 + $0x8] sm:$0xff]
    %v202 = vld [vmem:[#allocation2 + $0x10] sm:$0xff]
    %v203 = vld [vmem:[#allocation2 + $0x18] sm:$0xff]
    %v204 = vld [vmem:[#allocation2 + $0x20] sm:$0xff]
    %v205 = vld [vmem:[#allocation2 + $0x28] sm:$0xff]
    %v206 = vld [vmem:[#allocation2 + $0x30] sm:$0xff]
    %v207 = vld [vmem:[#allocation2 + $0x38] sm:$0xff]
    %v209 = vlaneseq
    %v210 = vshrl.u32 %v209, 7
    %v211 = vsub.s32 0, %v210
    %v212 = vrot.slane %v198, %v211
    %v213 = vlaneseq
    %v214 = vshrl.u32 %v213, 7
    %v215 = vsub.s32 1, %v214
    %v216 = vrot.slane %v198, %v215
    %v217 = vlaneseq
    %v218 = vshrl.u32 %v217, 7
    %v219 = vsub.s32 2, %v218
    %v220 = vrot.slane %v198, %v219
    %v221 = vlaneseq
    %v222 = vshrl.u32 %v221, 7
    %v223 = vsub.s32 3, %v222
    %v224 = vrot.slane %v198, %v223
    %229 = vmatprep.subr.mxu0 %v115
    %230 = vmatpush1.msra.mxu0 %v114
    %231 = vmatprep.subr.mxu0 %v111
    %232 = vmatpush1.msra.mxu0 %v110
    %233 = vmatprep.subr.mxu0 %v107
    %234 = vmatpush1.msra.mxu0 %v106
    %235 = vmatprep.subr.mxu0 %v103
    %236 = vmatpush1.msra.mxu0 %v102
    %237 = vmatprep.subr.mxu0 %v99
    %238 = vmatpush1.msra.mxu0 %v98
    %239 = vmatprep.subr.mxu0 %v95
    %240 = vmatpush1.msra.mxu0 %v94
    %241 = vmatprep.subr.mxu0 %v91
    %242 = vmatpush1.msra.mxu0 %v90
    %243 = vmatprep.subr.mxu0 %v87
    %244 = vmatpush1.msra.mxu0 %v86
    %245 = vmatprep.subr.mxu0 %v83
    %246 = vmatpush1.msra.mxu0 %v82
    %247 = vmatprep.subr.mxu0 %v79
    %248 = vmatpush1.msra.mxu0 %v78
    %249 = vmatprep.subr.mxu0 %v75
    %250 = vmatpush1.msra.mxu0 %v74
    %251 = vmatprep.subr.mxu0 %v71
    %252 = vmatpush1.msra.mxu0 %v70
    %253 = vmatprep.subr.mxu0 %v67
    %254 = vmatpush1.msra.mxu0 %v66
    %255 = vmatprep.subr.mxu0 %v63
    %256 = vmatpush1.msra.mxu0 %v62
    %257 = vmatprep.subr.mxu0 %v59
    %258 = vmatpush1.msra.mxu0 %v58
    %259 = vmatprep.subr.mxu0 %v55
    %260 = vmatpush1.msra.mxu0 %v54
    %261 = vmatprep.subr.mxu0 0.0
    %262 = vmatpush2.msra.mxu0 0.0
    %263 = vmatprep.subr.mxu0 0.0
    %264 = vmatpush2.msra.mxu0 0.0
    %265 = vmatprep.subr.mxu0 0.0
    %266 = vmatpush2.msra.mxu0 0.0
    %267 = vmatprep.subr.mxu0 0.0
    %268 = vmatpush2.msra.mxu0 0.0
    %269 = vmatprep.subr.mxu0 0.0
    %270 = vmatpush2.msra.mxu0 0.0
    %271 = vmatprep.subr.mxu0 0.0
    %272 = vmatpush2.msra.mxu0 0.0
    %273 = vmatprep.subr.mxu0 0.0
    %274 = vmatpush2.msra.mxu0 0.0
    %275 = vmatprep.subr.mxu0 0.0
    %276 = vmatpush2.msra.mxu0 0.0
    %277 = vmatprep.subr.mxu0 0.0
    %278 = vmatpush2.msra.mxu0 0.0
    %279 = vmatprep.subr.mxu0 0.0
    %280 = vmatpush2.msra.mxu0 0.0
    %281 = vmatprep.subr.mxu0 0.0
    %282 = vmatpush2.msra.mxu0 0.0
    %283 = vmatprep.subr.mxu0 0.0
    %284 = vmatpush2.msra.mxu0 0.0
    %285 = vmatprep.subr.mxu0 0.0
    %286 = vmatpush2.msra.mxu0 0.0
    %287 = vmatprep.subr.mxu0 0.0
    %288 = vmatpush2.msra.mxu0 0.0
    %289 = vmatprep.subr.mxu0 0.0
    %290 = vmatpush2.msra.mxu0 0.0
    %291 = vmatprep.subr.mxu0 0.0
    %292 = vmatpush2.msra.mxu0 0.0
    %293 = vmatprep.mubr.f32.mxu0 0.0
    %294 = vmatmul.mubr.f32.gmra.mxu0 %v200
    %v295 = vpop.f32.mrf.mxu0
    %v296 = vadd.f32 %v212, %v295
    %v297 = vpop.f32.mrf.mxu0
    %v298 = vadd.f32 %v216, %v297
    %299 = vmatprep.mubr.f32.mxu0 0.0
    %300 = vmatmul.mubr.f32.gmra.mxu0 %v201
    %v301 = vpop.f32.mrf.mxu0
    %v302 = vadd.f32 %v212, %v301
    %v303 = vpop.f32.mrf.mxu0
    %v304 = vadd.f32 %v216, %v303
    %305 = vmatprep.mubr.f32.mxu0 0.0
    %306 = vmatmul.mubr.f32.gmra.mxu0 %v202
    %v307 = vpop.f32.mrf.mxu0
    %v308 = vadd.f32 %v212, %v307
    %v309 = vpop.f32.mrf.mxu0
    %v310 = vadd.f32 %v216, %v309
    %311 = vmatprep.mubr.f32.mxu0 0.0
    %312 = vmatmul.mubr.f32.gmra.mxu0 %v203
    %v313 = vpop.f32.mrf.mxu0
    %v314 = vadd.f32 %v212, %v313
    %v315 = vpop.f32.mrf.mxu0
    %v316 = vadd.f32 %v216, %v315
    %317 = vmatprep.mubr.f32.mxu0 0.0
    %318 = vmatmul.mubr.f32.gmra.mxu0 %v204
    %v319 = vpop.f32.mrf.mxu0
    %v320 = vadd.f32 %v212, %v319
    %v321 = vpop.f32.mrf.mxu0
    %v322 = vadd.f32 %v216, %v321
    %323 = vmatprep.mubr.f32.mxu0 0.0
    %324 = vmatmul.mubr.f32.gmra.mxu0 %v205
    %v325 = vpop.f32.mrf.mxu0
    %v326 = vadd.f32 %v212, %v325
    %v327 = vpop.f32.mrf.mxu0
    %v328 = vadd.f32 %v216, %v327
    %329 = vmatprep.mubr.f32.mxu0 0.0
    %330 = vmatmul.mubr.f32.gmra.mxu0 %v206
    %v331 = vpop.f32.mrf.mxu0
    %v332 = vadd.f32 %v212, %v331
    %v333 = vpop.f32.mrf.mxu0
    %v334 = vadd.f32 %v216, %v333
    %335 = vmatprep.mubr.f32.mxu0 0.0
    %336 = vmatmul.mubr.f32.gmra.mxu0 %v207
    %v337 = vpop.f32.mrf.mxu0
    %v338 = vadd.f32 %v212, %v337
    %v339 = vpop.f32.mrf.mxu0
    %v340 = vadd.f32 %v216, %v339
    %341 = vdwg.mxu0
    %342 = vmatprep.subr.mxu0 %v117
    %343 = vmatpush1.msra.mxu0 %v116
    %344 = vmatprep.subr.mxu0 %v113
    %345 = vmatpush1.msra.mxu0 %v112
    %346 = vmatprep.subr.mxu0 %v109
    %347 = vmatpush1.msra.mxu0 %v108
    %348 = vmatprep.subr.mxu0 %v105
    %349 = vmatpush1.msra.mxu0 %v104
    %350 = vmatprep.subr.mxu0 %v101
    %351 = vmatpush1.msra.mxu0 %v100
    %352 = vmatprep.subr.mxu0 %v97
    %353 = vmatpush1.msra.mxu0 %v96
    %354 = vmatprep.subr.mxu0 %v93
    %355 = vmatpush1.msra.mxu0 %v92
    %356 = vmatprep.subr.mxu0 %v89
    %357 = vmatpush1.msra.mxu0 %v88
    %358 = vmatprep.subr.mxu0 %v85
    %359 = vmatpush1.msra.mxu0 %v84
    %360 = vmatprep.subr.mxu0 %v81
    %361 = vmatpush1.msra.mxu0 %v80
    %362 = vmatprep.subr.mxu0 %v77
    %363 = vmatpush1.msra.mxu0 %v76
    %364 = vmatprep.subr.mxu0 %v73
    %365 = vmatpush1.msra.mxu0 %v72
    %366 = vmatprep.subr.mxu0 %v69
    %367 = vmatpush1.msra.mxu0 %v68
    %368 = vmatprep.subr.mxu0 %v65
    %369 = vmatpush1.msra.mxu0 %v64
    %370 = vmatprep.subr.mxu0 %v61
    %371 = vmatpush1.msra.mxu0 %v60
    %372 = vmatprep.subr.mxu0 %v57
    %373 = vmatpush1.msra.mxu0 %v56
    %374 = vmatprep.subr.mxu0 0.0
    %375 = vmatpush2.msra.mxu0 0.0
    %376 = vmatprep.subr.mxu0 0.0
    %377 = vmatpush2.msra.mxu0 0.0
    %378 = vmatprep.subr.mxu0 0.0
    %379 = vmatpush2.msra.mxu0 0.0
    %380 = vmatprep.subr.mxu0 0.0
    %381 = vmatpush2.msra.mxu0 0.0
    %382 = vmatprep.subr.mxu0 0.0
    %383 = vmatpush2.msra.mxu0 0.0
    %384 = vmatprep.subr.mxu0 0.0
    %385 = vmatpush2.msra.mxu0 0.0
    %386 = vmatprep.subr.mxu0 0.0
    %387 = vmatpush2.msra.mxu0 0.0
    %388 = vmatprep.subr.mxu0 0.0
    %389 = vmatpush2.msra.mxu0 0.0
    %390 = vmatprep.subr.mxu0 0.0
    %391 = vmatpush2.msra.mxu0 0.0
    %392 = vmatprep.subr.mxu0 0.0
    %393 = vmatpush2.msra.mxu0 0.0
    %394 = vmatprep.subr.mxu0 0.0
    %395 = vmatpush2.msra.mxu0 0.0
    %396 = vmatprep.subr.mxu0 0.0
    %397 = vmatpush2.msra.mxu0 0.0
    %398 = vmatprep.subr.mxu0 0.0
    %399 = vmatpush2.msra.mxu0 0.0
    %400 = vmatprep.subr.mxu0 0.0
    %401 = vmatpush2.msra.mxu0 0.0
    %402 = vmatprep.subr.mxu0 0.0
    %403 = vmatpush2.msra.mxu0 0.0
    %404 = vmatprep.subr.mxu0 0.0
    %405 = vmatpush2.msra.mxu0 0.0
    %406 = vmatprep.mubr.f32.mxu0 0.0
    %407 = vmatmul.mubr.f32.gmra.mxu0 %v200
    %v408 = vpop.f32.mrf.mxu0
    %v409 = vadd.f32 %v220, %v408
    %v410 = vpop.f32.mrf.mxu0
    %v411 = vadd.f32 %v224, %v410
    %412 = vmatprep.mubr.f32.mxu0 0.0
    %413 = vmatmul.mubr.f32.gmra.mxu0 %v201
    %v414 = vpop.f32.mrf.mxu0
    %v415 = vadd.f32 %v220, %v414
    %v416 = vpop.f32.mrf.mxu0
    %v417 = vadd.f32 %v224, %v416
    %418 = vmatprep.mubr.f32.mxu0 0.0
    %419 = vmatmul.mubr.f32.gmra.mxu0 %v202
    %v420 = vpop.f32.mrf.mxu0
    %v421 = vadd.f32 %v220, %v420
    %v422 = vpop.f32.mrf.mxu0
    %v423 = vadd.f32 %v224, %v422
    %424 = vmatprep.mubr.f32.mxu0 0.0
    %425 = vmatmul.mubr.f32.gmra.mxu0 %v203
    %v426 = vpop.f32.mrf.mxu0
    %v427 = vadd.f32 %v220, %v426
    %v428 = vpop.f32.mrf.mxu0
    %v429 = vadd.f32 %v224, %v428
    %430 = vmatprep.mubr.f32.mxu0 0.0
    %431 = vmatmul.mubr.f32.gmra.mxu0 %v204
    %v432 = vpop.f32.mrf.mxu0
    %v433 = vadd.f32 %v220, %v432
    %v434 = vpop.f32.mrf.mxu0
    %v435 = vadd.f32 %v224, %v434
    %436 = vmatprep.mubr.f32.mxu0 0.0
    %437 = vmatmul.mubr.f32.gmra.mxu0 %v205
    %v438 = vpop.f32.mrf.mxu0
    %v439 = vadd.f32 %v220, %v438
    %v440 = vpop.f32.mrf.mxu0
    %v441 = vadd.f32 %v224, %v440
    %442 = vmatprep.mubr.f32.mxu0 0.0
    %443 = vmatmul.mubr.f32.gmra.mxu0 %v206
    %v444 = vpop.f32.mrf.mxu0
    %v445 = vadd.f32 %v220, %v444
    %v446 = vpop.f32.mrf.mxu0
    %v447 = vadd.f32 %v224, %v446
    %448 = vmatprep.mubr.f32.mxu0 0.0
    %449 = vmatmul.mubr.f32.gmra.mxu0 %v207
    %v450 = vpop.f32.mrf.mxu0
    %v451 = vadd.f32 %v220, %v450
    %v452 = vpop.f32.mrf.mxu0
    %v453 = vadd.f32 %v224, %v452
    %454 = vdwg.mxu0
    %455 = vmatprep.subr.mxu0 %v179
    %456 = vmatpush1.msra.mxu0 %v178
    %457 = vmatprep.subr.mxu0 %v175
    %458 = vmatpush1.msra.mxu0 %v174
    %459 = vmatprep.subr.mxu0 %v171
    %460 = vmatpush1.msra.mxu0 %v170
    %461 = vmatprep.subr.mxu0 %v167
    %462 = vmatpush1.msra.mxu0 %v166
    %463 = vmatprep.subr.mxu0 %v163
    %464 = vmatpush1.msra.mxu0 %v162
    %465 = vmatprep.subr.mxu0 %v159
    %466 = vmatpush1.msra.mxu0 %v158
    %467 = vmatprep.subr.mxu0 %v155
    %468 = vmatpush1.msra.mxu0 %v154
    %469 = vmatprep.subr.mxu0 %v151
    %470 = vmatpush1.msra.mxu0 %v150
    %471 = vmatprep.subr.mxu0 %v147
    %472 = vmatpush1.msra.mxu0 %v146
    %473 = vmatprep.subr.mxu0 %v143
    %474 = vmatpush1.msra.mxu0 %v142
    %475 = vmatprep.subr.mxu0 %v139
    %476 = vmatpush1.msra.mxu0 %v138
    %477 = vmatprep.subr.mxu0 %v135
    %478 = vmatpush1.msra.mxu0 %v134
    %479 = vmatprep.subr.mxu0 %v131
    %480 = vmatpush1.msra.mxu0 %v130
    %481 = vmatprep.subr.mxu0 %v127
    %482 = vmatpush1.msra.mxu0 %v126
    %483 = vmatprep.subr.mxu0 %v123
    %484 = vmatpush1.msra.mxu0 %v122
    %485 = vmatprep.subr.mxu0 %v119
    %486 = vmatpush1.msra.mxu0 %v118
    %487 = vmatprep.subr.mxu0 0.0
    %488 = vmatpush2.msra.mxu0 0.0
    %489 = vmatprep.subr.mxu0 0.0
    %490 = vmatpush2.msra.mxu0 0.0
    %491 = vmatprep.subr.mxu0 0.0
    %492 = vmatpush2.msra.mxu0 0.0
    %493 = vmatprep.subr.mxu0 0.0
    %494 = vmatpush2.msra.mxu0 0.0
    %495 = vmatprep.subr.mxu0 0.0
    %496 = vmatpush2.msra.mxu0 0.0
    %497 = vmatprep.subr.mxu0 0.0
    %498 = vmatpush2.msra.mxu0 0.0
    %499 = vmatprep.subr.mxu0 0.0
    %500 = vmatpush2.msra.mxu0 0.0
    %501 = vmatprep.subr.mxu0 0.0
    %502 = vmatpush2.msra.mxu0 0.0
    %503 = vmatprep.subr.mxu0 0.0
    %504 = vmatpush2.msra.mxu0 0.0
    %505 = vmatprep.subr.mxu0 0.0
    %506 = vmatpush2.msra.mxu0 0.0
    %507 = vmatprep.subr.mxu0 0.0
    %508 = vmatpush2.msra.mxu0 0.0
    %509 = vmatprep.subr.mxu0 0.0
    %510 = vmatpush2.msra.mxu0 0.0
    %511 = vmatprep.subr.mxu0 0.0
    %512 = vmatpush2.msra.mxu0 0.0
    %513 = vmatprep.subr.mxu0 0.0
    %514 = vmatpush2.msra.mxu0 0.0
    %515 = vmatprep.subr.mxu0 0.0
    %516 = vmatpush2.msra.mxu0 0.0
    %517 = vmatprep.subr.mxu0 0.0
    %518 = vmatpush2.msra.mxu0 0.0
    %519 = vmatprep.mubr.f32.mxu0 0.0
    %520 = vmatmul.mubr.f32.gmra.mxu0 0.0
    %v521 = vpop.f32.mrf.mxu0
    %v522 = vadd.f32 0.0, %v521
    %v523 = vpop.f32.mrf.mxu0
    %v524 = vadd.f32 0.0, %v523
    %525 = vdwg.mxu0
    %526 = vmatprep.subr.mxu0 %v181
    %527 = vmatpush1.msra.mxu0 %v180
    %528 = vmatprep.subr.mxu0 %v177
    %529 = vmatpush1.msra.mxu0 %v176
    %530 = vmatprep.subr.mxu0 %v173
    %531 = vmatpush1.msra.mxu0 %v172
    %532 = vmatprep.subr.mxu0 %v169
    %533 = vmatpush1.msra.mxu0 %v168
    %534 = vmatprep.subr.mxu0 %v165
    %535 = vmatpush1.msra.mxu0 %v164
    %536 = vmatprep.subr.mxu0 %v161
    %537 = vmatpush1.msra.mxu0 %v160
    %538 = vmatprep.subr.mxu0 %v157
    %539 = vmatpush1.msra.mxu0 %v156
    %540 = vmatprep.subr.mxu0 %v153
    %541 = vmatpush1.msra.mxu0 %v152
    %542 = vmatprep.subr.mxu0 %v149
    %543 = vmatpush1.msra.mxu0 %v148
    %544 = vmatprep.subr.mxu0 %v145
    %545 = vmatpush1.msra.mxu0 %v144
    %546 = vmatprep.subr.mxu0 %v141
    %547 = vmatpush1.msra.mxu0 %v140
    %548 = vmatprep.subr.mxu0 %v137
    %549 = vmatpush1.msra.mxu0 %v136
    %550 = vmatprep.subr.mxu0 %v133
    %551 = vmatpush1.msra.mxu0 %v132
    %552 = vmatprep.subr.mxu0 %v129
    %553 = vmatpush1.msra.mxu0 %v128
    %554 = vmatprep.subr.mxu0 %v125
    %555 = vmatpush1.msra.mxu0 %v124
    %556 = vmatprep.subr.mxu0 %v121
    %557 = vmatpush1.msra.mxu0 %v120
    %558 = vmatprep.subr.mxu0 0.0
    %559 = vmatpush2.msra.mxu0 0.0
    %560 = vmatprep.subr.mxu0 0.0
    %561 = vmatpush2.msra.mxu0 0.0
    %562 = vmatprep.subr.mxu0 0.0
    %563 = vmatpush2.msra.mxu0 0.0
    %564 = vmatprep.subr.mxu0 0.0
    %565 = vmatpush2.msra.mxu0 0.0
    %566 = vmatprep.subr.mxu0 0.0
    %567 = vmatpush2.msra.mxu0 0.0
    %568 = vmatprep.subr.mxu0 0.0
    %569 = vmatpush2.msra.mxu0 0.0
    %570 = vmatprep.subr.mxu0 0.0
    %571 = vmatpush2.msra.mxu0 0.0
    %572 = vmatprep.subr.mxu0 0.0
    %573 = vmatpush2.msra.mxu0 0.0
    %574 = vmatprep.subr.mxu0 0.0
    %575 = vmatpush2.msra.mxu0 0.0
    %576 = vmatprep.subr.mxu0 0.0
    %577 = vmatpush2.msra.mxu0 0.0
    %578 = vmatprep.subr.mxu0 0.0
    %579 = vmatpush2.msra.mxu0 0.0
    %580 = vmatprep.subr.mxu0 0.0
    %581 = vmatpush2.msra.mxu0 0.0
    %582 = vmatprep.subr.mxu0 0.0
    %583 = vmatpush2.msra.mxu0 0.0
    %584 = vmatprep.subr.mxu0 0.0
    %585 = vmatpush2.msra.mxu0 0.0
    %586 = vmatprep.subr.mxu0 0.0
    %587 = vmatpush2.msra.mxu0 0.0
    %588 = vmatprep.subr.mxu0 0.0
    %589 = vmatpush2.msra.mxu0 0.0
    %590 = vmatprep.mubr.f32.mxu0 0.0
    %591 = vmatmul.mubr.f32.gmra.mxu0 0.0
    %v592 = vpop.f32.mrf.mxu0
    %v593 = vadd.f32 0.0, %v592
    %v594 = vpop.f32.mrf.mxu0
    %v595 = vadd.f32 0.0, %v594
    %596 = vdwg.mxu0
    %v597 = vadd.f32 %v296, %v522
    %v598 = vadd.f32 %v298, %v524
    %v599 = vadd.f32 %v409, %v593
    %v600 = vadd.f32 %v411, %v595
    %v601 = vxor.u32 %v597, 2147483648
    %v602 = vmul.f32 %v601, 1.442695
    %v603 = vpow.pop %v602
    %v604 = vadd.f32 %v603, 1.0
    %v605 = vrcp.pop %v604
    %v606 = vmul.f32 1.0, %v605
    %v607 = vxor.u32 %v598, 2147483648
    %v608 = vmul.f32 %v607, 1.442695
    %v609 = vpow.pop %v608
    %v610 = vadd.f32 %v609, 1.0
    %v611 = vrcp.pop %v610
    %v612 = vmul.f32 1.0, %v611
    %v613 = vtanh.pop %v599
    %v614 = vxor.u32 %v600, 2147483648
    %v615 = vmul.f32 %v614, 1.442695
    %v616 = vpow.pop %v615
    %v617 = vadd.f32 %v616, 1.0
    %v618 = vrcp.pop %v617
    %v619 = vmul.f32 1.0, %v618
    %v620 = vmul.f32 %v612, 0.0
    %v621 = vmul.f32 %v606, %v613
    %v622 = vadd.f32 %v620, %v621
    %v623 = vtanh.pop %v622
    %v624 = vmul.f32 %v619, %v623
    %625 = vmatprep.subr.mxu0 %v179
    %626 = vmatpush1.msra.mxu0 %v178
    %627 = vmatprep.subr.mxu0 %v175
    %628 = vmatpush1.msra.mxu0 %v174
    %629 = vmatprep.subr.mxu0 %v171
    %630 = vmatpush1.msra.mxu0 %v170
    %631 = vmatprep.subr.mxu0 %v167
    %632 = vmatpush1.msra.mxu0 %v166
    %633 = vmatprep.subr.mxu0 %v163
    %634 = vmatpush1.msra.mxu0 %v162
    %635 = vmatprep.subr.mxu0 %v159
    %636 = vmatpush1.msra.mxu0 %v158
    %637 = vmatprep.subr.mxu0 %v155
    %638 = vmatpush1.msra.mxu0 %v154
    %639 = vmatprep.subr.mxu0 %v151
    %640 = vmatpush1.msra.mxu0 %v150
    %641 = vmatprep.subr.mxu0 %v147
    %642 = vmatpush1.msra.mxu0 %v146
    %643 = vmatprep.subr.mxu0 %v143
    %644 = vmatpush1.msra.mxu0 %v142
    %645 = vmatprep.subr.mxu0 %v139
    %646 = vmatpush1.msra.mxu0 %v138
    %647 = vmatprep.subr.mxu0 %v135
    %648 = vmatpush1.msra.mxu0 %v134
    %649 = vmatprep.subr.mxu0 %v131
    %650 = vmatpush1.msra.mxu0 %v130
    %651 = vmatprep.subr.mxu0 %v127
    %652 = vmatpush1.msra.mxu0 %v126
    %653 = vmatprep.subr.mxu0 %v123
    %654 = vmatpush1.msra.mxu0 %v122
    %655 = vmatprep.subr.mxu0 %v119
    %656 = vmatpush1.msra.mxu0 %v118
    %657 = vmatprep.subr.mxu0 0.0
    %658 = vmatpush2.msra.mxu0 0.0
    %659 = vmatprep.subr.mxu0 0.0
    %660 = vmatpush2.msra.mxu0 0.0
    %661 = vmatprep.subr.mxu0 0.0
    %662 = vmatpush2.msra.mxu0 0.0
    %663 = vmatprep.subr.mxu0 0.0
    %664 = vmatpush2.msra.mxu0 0.0
    %665 = vmatprep.subr.mxu0 0.0
    %666 = vmatpush2.msra.mxu0 0.0
    %667 = vmatprep.subr.mxu0 0.0
    %668 = vmatpush2.msra.mxu0 0.0
    %669 = vmatprep.subr.mxu0 0.0
    %670 = vmatpush2.msra.mxu0 0.0
    %671 = vmatprep.subr.mxu0 0.0
    %672 = vmatpush2.msra.mxu0 0.0
    %673 = vmatprep.subr.mxu0 0.0
    %674 = vmatpush2.msra.mxu0 0.0
    %675 = vmatprep.subr.mxu0 0.0
    %676 = vmatpush2.msra.mxu0 0.0
    %677 = vmatprep.subr.mxu0 0.0
    %678 = vmatpush2.msra.mxu0 0.0
    %679 = vmatprep.subr.mxu0 0.0
    %680 = vmatpush2.msra.mxu0 0.0
    %681 = vmatprep.subr.mxu0 0.0
    %682 = vmatpush2.msra.mxu0 0.0
    %683 = vmatprep.subr.mxu0 0.0
    %684 = vmatpush2.msra.mxu0 0.0
    %685 = vmatprep.subr.mxu0 0.0
    %686 = vmatpush2.msra.mxu0 0.0
    %687 = vmatprep.subr.mxu0 0.0
    %688 = vmatpush2.msra.mxu0 0.0
    %689 = vmatprep.mubr.f32.mxu0 0.0
    %690 = vmatmul.mubr.f32.gmra.mxu0 %v624
    %v691 = vpop.f32.mrf.mxu0
    %v692 = vadd.f32 0.0, %v691
    %v693 = vpop.f32.mrf.mxu0
    %v694 = vadd.f32 0.0, %v693
    %695 = vdwg.mxu0
    %696 = vmatprep.subr.mxu0 %v181
    %697 = vmatpush1.msra.mxu0 %v180
    %698 = vmatprep.subr.mxu0 %v177
    %699 = vmatpush1.msra.mxu0 %v176
    %700 = vmatprep.subr.mxu0 %v173
    %701 = vmatpush1.msra.mxu0 %v172
    %702 = vmatprep.subr.mxu0 %v169
    %703 = vmatpush1.msra.mxu0 %v168
    %704 = vmatprep.subr.mxu0 %v165
    %705 = vmatpush1.msra.mxu0 %v164
    %706 = vmatprep.subr.mxu0 %v161
    %707 = vmatpush1.msra.mxu0 %v160
    %708 = vmatprep.subr.mxu0 %v157
    %709 = vmatpush1.msra.mxu0 %v156
    %710 = vmatprep.subr.mxu0 %v153
    %711 = vmatpush1.msra.mxu0 %v152
    %712 = vmatprep.subr.mxu0 %v149
    %713 = vmatpush1.msra.mxu0 %v148
    %714 = vmatprep.subr.mxu0 %v145
    %715 = vmatpush1.msra.mxu0 %v144
    %716 = vmatprep.subr.mxu0 %v141
    %717 = vmatpush1.msra.mxu0 %v140
    %718 = vmatprep.subr.mxu0 %v137
    %719 = vmatpush1.msra.mxu0 %v136
    %720 = vmatprep.subr.mxu0 %v133
    %721 = vmatpush1.msra.mxu0 %v132
    %722 = vmatprep.subr.mxu0 %v129
    %723 = vmatpush1.msra.mxu0 %v128
    %724 = vmatprep.subr.mxu0 %v125
    %725 = vmatpush1.msra.mxu0 %v124
    %726 = vmatprep.subr.mxu0 %v121
    %727 = vmatpush1.msra.mxu0 %v120
    %728 = vmatprep.subr.mxu0 0.0
    %729 = vmatpush2.msra.mxu0 0.0
    %730 = vmatprep.subr.mxu0 0.0
    %731 = vmatpush2.msra.mxu0 0.0
    %732 = vmatprep.subr.mxu0 0.0
    %733 = vmatpush2.msra.mxu0 0.0
    %734 = vmatprep.subr.mxu0 0.0
    %735 = vmatpush2.msra.mxu0 0.0
    %736 = vmatprep.subr.mxu0 0.0
    %737 = vmatpush2.msra.mxu0 0.0
    %738 = vmatprep.subr.mxu0 0.0
    %739 = vmatpush2.msra.mxu0 0.0
    %740 = vmatprep.subr.mxu0 0.0
    %741 = vmatpush2.msra.mxu0 0.0
    %742 = vmatprep.subr.mxu0 0.0
    %743 = vmatpush2.msra.mxu0 0.0
    %744 = vmatprep.subr.mxu0 0.0
    %745 = vmatpush2.msra.mxu0 0.0
    %746 = vmatprep.subr.mxu0 0.0
    %747 = vmatpush2.msra.mxu0 0.0
    %748 = vmatprep.subr.mxu0 0.0
    %749 = vmatpush2.msra.mxu0 0.0
    %750 = vmatprep.subr.mxu0 0.0
    %751 = vmatpush2.msra.mxu0 0.0
    %752 = vmatprep.subr.mxu0 0.0
    %753 = vmatpush2.msra.mxu0 0.0
    %754 = vmatprep.subr.mxu0 0.0
    %755 = vmatpush2.msra.mxu0 0.0
    %756 = vmatprep.subr.mxu0 0.0
    %757 = vmatpush2.msra.mxu0 0.0
    %758 = vmatprep.subr.mxu0 0.0
    %759 = vmatpush2.msra.mxu0 0.0
    %760 = vmatprep.mubr.f32.mxu0 0.0
    %761 = vmatmul.mubr.f32.gmra.mxu0 %v624
    %v762 = vpop.f32.mrf.mxu0
    %v763 = vadd.f32 0.0, %v762
    %v764 = vpop.f32.mrf.mxu0
    %v765 = vadd.f32 0.0, %v764
    %766 = vdwg.mxu0
    %v767 = vadd.f32 %v302, %v692
    %v768 = vadd.f32 %v304, %v694
    %v769 = vadd.f32 %v415, %v763
    %v770 = vadd.f32 %v417, %v765
    %v771 = vxor.u32 %v767, 2147483648
    %v772 = vmul.f32 %v771, 1.442695
    %v773 = vpow.pop %v772
    %v774 = vadd.f32 %v773, 1.0
    %v775 = vrcp.pop %v774
    %v776 = vmul.f32 1.0, %v775
    %v777 = vxor.u32 %v768, 2147483648
    %v778 = vmul.f32 %v777, 1.442695
    %v779 = vpow.pop %v778
    %v780 = vadd.f32 %v779, 1.0
    %v781 = vrcp.pop %v780
    %v782 = vmul.f32 1.0, %v781
    %v783 = vtanh.pop %v769
    %v784 = vxor.u32 %v770, 2147483648
    %v785 = vmul.f32 %v784, 1.442695
    %v786 = vpow.pop %v785
    %v787 = vadd.f32 %v786, 1.0
    %v788 = vrcp.pop %v787
    %v789 = vmul.f32 1.0, %v788
    %v790 = vmul.f32 %v782, %v622
    %v791 = vmul.f32 %v776, %v783
    %v792 = vadd.f32 %v790, %v791
    %v793 = vtanh.pop %v792
    %v794 = vmul.f32 %v789, %v793
    %795 = vmatprep.subr.mxu0 %v179
    %796 = vmatpush1.msra.mxu0 %v178
    %797 = vmatprep.subr.mxu0 %v175
    %798 = vmatpush1.msra.mxu0 %v174
    %799 = vmatprep.subr.mxu0 %v171
    %800 = vmatpush1.msra.mxu0 %v170
    %801 = vmatprep.subr.mxu0 %v167
    %802 = vmatpush1.msra.mxu0 %v166
    %803 = vmatprep.subr.mxu0 %v163
    %804 = vmatpush1.msra.mxu0 %v162
    %805 = vmatprep.subr.mxu0 %v159
    %806 = vmatpush1.msra.mxu0 %v158
    %807 = vmatprep.subr.mxu0 %v155
    %808 = vmatpush1.msra.mxu0 %v154
    %809 = vmatprep.subr.mxu0 %v151
    %810 = vmatpush1.msra.mxu0 %v150
    %811 = vmatprep.subr.mxu0 %v147
    %812 = vmatpush1.msra.mxu0 %v146
    %813 = vmatprep.subr.mxu0 %v143
    %814 = vmatpush1.msra.mxu0 %v142
    %815 = vmatprep.subr.mxu0 %v139
    %816 = vmatpush1.msra.mxu0 %v138
    %817 = vmatprep.subr.mxu0 %v135
    %818 = vmatpush1.msra.mxu0 %v134
    %819 = vmatprep.subr.mxu0 %v131
    %820 = vmatpush1.msra.mxu0 %v130
    %821 = vmatprep.subr.mxu0 %v127
    %822 = vmatpush1.msra.mxu0 %v126
    %823 = vmatprep.subr.mxu0 %v123
    %824 = vmatpush1.msra.mxu0 %v122
    %825 = vmatprep.subr.mxu0 %v119
    %826 = vmatpush1.msra.mxu0 %v118
    %827 = vmatprep.subr.mxu0 0.0
    %828 = vmatpush2.msra.mxu0 0.0
    %829 = vmatprep.subr.mxu0 0.0
    %830 = vmatpush2.msra.mxu0 0.0
    %831 = vmatprep.subr.mxu0 0.0
    %832 = vmatpush2.msra.mxu0 0.0
    %833 = vmatprep.subr.mxu0 0.0
    %834 = vmatpush2.msra.mxu0 0.0
    %835 = vmatprep.subr.mxu0 0.0
    %836 = vmatpush2.msra.mxu0 0.0
    %837 = vmatprep.subr.mxu0 0.0
    %838 = vmatpush2.msra.mxu0 0.0
    %839 = vmatprep.subr.mxu0 0.0
    %840 = vmatpush2.msra.mxu0 0.0
    %841 = vmatprep.subr.mxu0 0.0
    %842 = vmatpush2.msra.mxu0 0.0
    %843 = vmatprep.subr.mxu0 0.0
    %844 = vmatpush2.msra.mxu0 0.0
    %845 = vmatprep.subr.mxu0 0.0
    %846 = vmatpush2.msra.mxu0 0.0
    %847 = vmatprep.subr.mxu0 0.0
    %848 = vmatpush2.msra.mxu0 0.0
    %849 = vmatprep.subr.mxu0 0.0
    %850 = vmatpush2.msra.mxu0 0.0
    %851 = vmatprep.subr.mxu0 0.0
    %852 = vmatpush2.msra.mxu0 0.0
    %853 = vmatprep.subr.mxu0 0.0
    %854 = vmatpush2.msra.mxu0 0.0
    %855 = vmatprep.subr.mxu0 0.0
    %856 = vmatpush2.msra.mxu0 0.0
    %857 = vmatprep.subr.mxu0 0.0
    %858 = vmatpush2.msra.mxu0 0.0
    %859 = vmatprep.mubr.f32.mxu0 0.0
    %860 = vmatmul.mubr.f32.gmra.mxu0 %v794
    %v861 = vpop.f32.mrf.mxu0
    %v862 = vadd.f32 0.0, %v861
    %v863 = vpop.f32.mrf.mxu0
    %v864 = vadd.f32 0.0, %v863
    %865 = vdwg.mxu0
    %866 = vmatprep.subr.mxu0 %v181
    %867 = vmatpush1.msra.mxu0 %v180
    %868 = vmatprep.subr.mxu0 %v177
    %869 = vmatpush1.msra.mxu0 %v176
    %870 = vmatprep.subr.mxu0 %v173
    %871 = vmatpush1.msra.mxu0 %v172
    %872 = vmatprep.subr.mxu0 %v169
    %873 = vmatpush1.msra.mxu0 %v168
    %874 = vmatprep.subr.mxu0 %v165
    %875 = vmatpush1.msra.mxu0 %v164
    %876 = vmatprep.subr.mxu0 %v161
    %877 = vmatpush1.msra.mxu0 %v160
    %878 = vmatprep.subr.mxu0 %v157
    %879 = vmatpush1.msra.mxu0 %v156
    %880 = vmatprep.subr.mxu0 %v153
    %881 = vmatpush1.msra.mxu0 %v152
    %882 = vmatprep.subr.mxu0 %v149
    %883 = vmatpush1.msra.mxu0 %v148
    %884 = vmatprep.subr.mxu0 %v145
    %885 = vmatpush1.msra.mxu0 %v144
    %886 = vmatprep.subr.mxu0 %v141
    %887 = vmatpush1.msra.mxu0 %v140
    %888 = vmatprep.subr.mxu0 %v137
    %889 = vmatpush1.msra.mxu0 %v136
    %890 = vmatprep.subr.mxu0 %v133
    %891 = vmatpush1.msra.mxu0 %v132
    %892 = vmatprep.subr.mxu0 %v129
    %893 = vmatpush1.msra.mxu0 %v128
    %894 = vmatprep.subr.mxu0 %v125
    %895 = vmatpush1.msra.mxu0 %v124
    %896 = vmatprep.subr.mxu0 %v121
    %897 = vmatpush1.msra.mxu0 %v120
    %898 = vmatprep.subr.mxu0 0.0
    %899 = vmatpush2.msra.mxu0 0.0
    %900 = vmatprep.subr.mxu0 0.0
    %901 = vmatpush2.msra.mxu0 0.0
    %902 = vmatprep.subr.mxu0 0.0
    %903 = vmatpush2.msra.mxu0 0.0
    %904 = vmatprep.subr.mxu0 0.0
    %905 = vmatpush2.msra.mxu0 0.0
    %906 = vmatprep.subr.mxu0 0.0
    %907 = vmatpush2.msra.mxu0 0.0
    %908 = vmatprep.subr.mxu0 0.0
    %909 = vmatpush2.msra.mxu0 0.0
    %910 = vmatprep.subr.mxu0 0.0
    %911 = vmatpush2.msra.mxu0 0.0
    %912 = vmatprep.subr.mxu0 0.0
    %913 = vmatpush2.msra.mxu0 0.0
    %914 = vmatprep.subr.mxu0 0.0
    %915 = vmatpush2.msra.mxu0 0.0
    %916 = vmatprep.subr.mxu0 0.0
    %917 = vmatpush2.msra.mxu0 0.0
    %918 = vmatprep.subr.mxu0 0.0
    %919 = vmatpush2.msra.mxu0 0.0
    %920 = vmatprep.subr.mxu0 0.0
    %921 = vmatpush2.msra.mxu0 0.0
    %922 = vmatprep.subr.mxu0 0.0
    %923 = vmatpush2.msra.mxu0 0.0
    %924 = vmatprep.subr.mxu0 0.0
    %925 = vmatpush2.msra.mxu0 0.0
    %926 = vmatprep.subr.mxu0 0.0
    %927 = vmatpush2.msra.mxu0 0.0
    %928 = vmatprep.subr.mxu0 0.0
    %929 = vmatpush2.msra.mxu0 0.0
    %930 = vmatprep.mubr.f32.mxu0 0.0
    %931 = vmatmul.mubr.f32.gmra.mxu0 %v794
    %v932 = vpop.f32.mrf.mxu0
    %v933 = vadd.f32 0.0, %v932
    %v934 = vpop.f32.mrf.mxu0
    %v935 = vadd.f32 0.0, %v934
    %936 = vdwg.mxu0
    %v937 = vadd.f32 %v308, %v862
    %v938 = vadd.f32 %v310, %v864
    %v939 = vadd.f32 %v421, %v933
    %v940 = vadd.f32 %v423, %v935
    %v941 = vxor.u32 %v937, 2147483648
    %v942 = vmul.f32 %v941, 1.442695
    %v943 = vpow.pop %v942
    %v944 = vadd.f32 %v943, 1.0
    %v945 = vrcp.pop %v944
    %v946 = vmul.f32 1.0, %v945
    %v947 = vxor.u32 %v938, 2147483648
    %v948 = vmul.f32 %v947, 1.442695
    %v949 = vpow.pop %v948
    %v950 = vadd.f32 %v949, 1.0
    %v951 = vrcp.pop %v950
    %v952 = vmul.f32 1.0, %v951
    %v953 = vtanh.pop %v939
    %v954 = vxor.u32 %v940, 2147483648
    %v955 = vmul.f32 %v954, 1.442695
    %v956 = vpow.pop %v955
    %v957 = vadd.f32 %v956, 1.0
    %v958 = vrcp.pop %v957
    %v959 = vmul.f32 1.0, %v958
    %v960 = vmul.f32 %v952, %v792
    %v961 = vmul.f32 %v946, %v953
    %v962 = vadd.f32 %v960, %v961
    %v963 = vtanh.pop %v962
    %v964 = vmul.f32 %v959, %v963
    %965 = vmatprep.subr.mxu0 %v179
    %966 = vmatpush1.msra.mxu0 %v178
    %967 = vmatprep.subr.mxu0 %v175
    %968 = vmatpush1.msra.mxu0 %v174
    %969 = vmatprep.subr.mxu0 %v171
    %970 = vmatpush1.msra.mxu0 %v170
    %971 = vmatprep.subr.mxu0 %v167
    %972 = vmatpush1.msra.mxu0 %v166
    %973 = vmatprep.subr.mxu0 %v163
    %974 = vmatpush1.msra.mxu0 %v162
    %975 = vmatprep.subr.mxu0 %v159
    %976 = vmatpush1.msra.mxu0 %v158
    %977 = vmatprep.subr.mxu0 %v155
    %978 = vmatpush1.msra.mxu0 %v154
    %979 = vmatprep.subr.mxu0 %v151
    %980 = vmatpush1.msra.mxu0 %v150
    %981 = vmatprep.subr.mxu0 %v147
    %982 = vmatpush1.msra.mxu0 %v146
    %983 = vmatprep.subr.mxu0 %v143
    %984 = vmatpush1.msra.mxu0 %v142
    %985 = vmatprep.subr.mxu0 %v139
    %986 = vmatpush1.msra.mxu0 %v138
    %987 = vmatprep.subr.mxu0 %v135
    %988 = vmatpush1.msra.mxu0 %v134
    %989 = vmatprep.subr.mxu0 %v131
    %990 = vmatpush1.msra.mxu0 %v130
    %991 = vmatprep.subr.mxu0 %v127
    %992 = vmatpush1.msra.mxu0 %v126
    %993 = vmatprep.subr.mxu0 %v123
    %994 = vmatpush1.msra.mxu0 %v122
    %995 = vmatprep.subr.mxu0 %v119
    %996 = vmatpush1.msra.mxu0 %v118
    %997 = vmatprep.subr.mxu0 0.0
    %998 = vmatpush2.msra.mxu0 0.0
    %999 = vmatprep.subr.mxu0 0.0
    %1000 = vmatpush2.msra.mxu0 0.0
    %1001 = vmatprep.subr.mxu0 0.0
    %1002 = vmatpush2.msra.mxu0 0.0
    %1003 = vmatprep.subr.mxu0 0.0
    %1004 = vmatpush2.msra.mxu0 0.0
    %1005 = vmatprep.subr.mxu0 0.0
    %1006 = vmatpush2.msra.mxu0 0.0
    %1007 = vmatprep.subr.mxu0 0.0
    %1008 = vmatpush2.msra.mxu0 0.0
    %1009 = vmatprep.subr.mxu0 0.0
    %1010 = vmatpush2.msra.mxu0 0.0
    %1011 = vmatprep.subr.mxu0 0.0
    %1012 = vmatpush2.msra.mxu0 0.0
    %1013 = vmatprep.subr.mxu0 0.0
    %1014 = vmatpush2.msra.mxu0 0.0
    %1015 = vmatprep.subr.mxu0 0.0
    %1016 = vmatpush2.msra.mxu0 0.0
    %1017 = vmatprep.subr.mxu0 0.0
    %1018 = vmatpush2.msra.mxu0 0.0
    %1019 = vmatprep.subr.mxu0 0.0
    %1020 = vmatpush2.msra.mxu0 0.0
    %1021 = vmatprep.subr.mxu0 0.0
    %1022 = vmatpush2.msra.mxu0 0.0
    %1023 = vmatprep.subr.mxu0 0.0
    %1024 = vmatpush2.msra.mxu0 0.0
    %1025 = vmatprep.subr.mxu0 0.0
    %1026 = vmatpush2.msra.mxu0 0.0
    %1027 = vmatprep.subr.mxu0 0.0
    %1028 = vmatpush2.msra.mxu0 0.0
    %1029 = vmatprep.mubr.f32.mxu0 0.0
    %1030 = vmatmul.mubr.f32.gmra.mxu0 %v964
    %v1031 = vpop.f32.mrf.mxu0
    %v1032 = vadd.f32 0.0, %v1031
    %v1033 = vpop.f32.mrf.mxu0
    %v1034 = vadd.f32 0.0, %v1033
    %1035 = vdwg.mxu0
    %1036 = vmatprep.subr.mxu0 %v181
    %1037 = vmatpush1.msra.mxu0 %v180
    %1038 = vmatprep.subr.mxu0 %v177
    %1039 = vmatpush1.msra.mxu0 %v176
    %1040 = vmatprep.subr.mxu0 %v173
    %1041 = vmatpush1.msra.mxu0 %v172
    %1042 = vmatprep.subr.mxu0 %v169
    %1043 = vmatpush1.msra.mxu0 %v168
    %1044 = vmatprep.subr.mxu0 %v165
    %1045 = vmatpush1.msra.mxu0 %v164
    %1046 = vmatprep.subr.mxu0 %v161
    %1047 = vmatpush1.msra.mxu0 %v160
    %1048 = vmatprep.subr.mxu0 %v157
    %1049 = vmatpush1.msra.mxu0 %v156
    %1050 = vmatprep.subr.mxu0 %v153
    %1051 = vmatpush1.msra.mxu0 %v152
    %1052 = vmatprep.subr.mxu0 %v149
    %1053 = vmatpush1.msra.mxu0 %v148
    %1054 = vmatprep.subr.mxu0 %v145
    %1055 = vmatpush1.msra.mxu0 %v144
    %1056 = vmatprep.subr.mxu0 %v141
    %1057 = vmatpush1.msra.mxu0 %v140
    %1058 = vmatprep.subr.mxu0 %v137
    %1059 = vmatpush1.msra.mxu0 %v136
    %1060 = vmatprep.subr.mxu0 %v133
    %1061 = vmatpush1.msra.mxu0 %v132
    %1062 = vmatprep.subr.mxu0 %v129
    %1063 = vmatpush1.msra.mxu0 %v128
    %1064 = vmatprep.subr.mxu0 %v125
    %1065 = vmatpush1.msra.mxu0 %v124
    %1066 = vmatprep.subr.mxu0 %v121
    %1067 = vmatpush1.msra.mxu0 %v120
    %1068 = vmatprep.subr.mxu0 0.0
    %1069 = vmatpush2.msra.mxu0 0.0
    %1070 = vmatprep.subr.mxu0 0.0
    %1071 = vmatpush2.msra.mxu0 0.0
    %1072 = vmatprep.subr.mxu0 0.0
    %1073 = vmatpush2.msra.mxu0 0.0
    %1074 = vmatprep.subr.mxu0 0.0
    %1075 = vmatpush2.msra.mxu0 0.0
    %1076 = vmatprep.subr.mxu0 0.0
    %1077 = vmatpush2.msra.mxu0 0.0
    %1078 = vmatprep.subr.mxu0 0.0
    %1079 = vmatpush2.msra.mxu0 0.0
    %1080 = vmatprep.subr.mxu0 0.0
    %1081 = vmatpush2.msra.mxu0 0.0
    %1082 = vmatprep.subr.mxu0 0.0
    %1083 = vmatpush2.msra.mxu0 0.0
    %1084 = vmatprep.subr.mxu0 0.0
    %1085 = vmatpush2.msra.mxu0 0.0
    %1086 = vmatprep.subr.mxu0 0.0
    %1087 = vmatpush2.msra.mxu0 0.0
    %1088 = vmatprep.subr.mxu0 0.0
    %1089 = vmatpush2.msra.mxu0 0.0
    %1090 = vmatprep.subr.mxu0 0.0
    %1091 = vmatpush2.msra.mxu0 0.0
    %1092 = vmatprep.subr.mxu0 0.0
    %1093 = vmatpush2.msra.mxu0 0.0
    %1094 = vmatprep.subr.mxu0 0.0
    %1095 = vmatpush2.msra.mxu0 0.0
    %1096 = vmatprep.subr.mxu0 0.0
    %1097 = vmatpush2.msra.mxu0 0.0
    %1098 = vmatprep.subr.mxu0 0.0
    %1099 = vmatpush2.msra.mxu0 0.0
    %1100 = vmatprep.mubr.f32.mxu0 0.0
    %1101 = vmatmul.mubr.f32.gmra.mxu0 %v964
    %v1102 = vpop.f32.mrf.mxu0
    %v1103 = vadd.f32 0.0, %v1102
    %v1104 = vpop.f32.mrf.mxu0
    %v1105 = vadd.f32 0.0, %v1104
    %1106 = vdwg.mxu0
    %v1107 = vadd.f32 %v314, %v1032
    %v1108 = vadd.f32 %v316, %v1034
    %v1109 = vadd.f32 %v427, %v1103
    %v1110 = vadd.f32 %v429, %v1105
    %v1111 = vxor.u32 %v1107, 2147483648
    %v1112 = vmul.f32 %v1111, 1.442695
    %v1113 = vpow.pop %v1112
    %v1114 = vadd.f32 %v1113, 1.0
    %v1115 = vrcp.pop %v1114
    %v1116 = vmul.f32 1.0, %v1115
    %v1117 = vxor.u32 %v1108, 2147483648
    %v1118 = vmul.f32 %v1117, 1.442695
    %v1119 = vpow.pop %v1118
    %v1120 = vadd.f32 %v1119, 1.0
    %v1121 = vrcp.pop %v1120
    %v1122 = vmul.f32 1.0, %v1121
    %v1123 = vtanh.pop %v1109
    %v1124 = vxor.u32 %v1110, 2147483648
    %v1125 = vmul.f32 %v1124, 1.442695
    %v1126 = vpow.pop %v1125
    %v1127 = vadd.f32 %v1126, 1.0
    %v1128 = vrcp.pop %v1127
    %v1129 = vmul.f32 1.0, %v1128
    %v1130 = vmul.f32 %v1122, %v962
    %v1131 = vmul.f32 %v1116, %v1123
    %v1132 = vadd.f32 %v1130, %v1131
    %v1133 = vtanh.pop %v1132
    %v1134 = vmul.f32 %v1129, %v1133
    %1135 = vmatprep.subr.mxu0 %v179
    %1136 = vmatpush1.msra.mxu0 %v178
    %1137 = vmatprep.subr.mxu0 %v175
    %1138 = vmatpush1.msra.mxu0 %v174
    %1139 = vmatprep.subr.mxu0 %v171
    %1140 = vmatpush1.msra.mxu0 %v170
    %1141 = vmatprep.subr.mxu0 %v167
    %1142 = vmatpush1.msra.mxu0 %v166
    %1143 = vmatprep.subr.mxu0 %v163
    %1144 = vmatpush1.msra.mxu0 %v162
    %1145 = vmatprep.subr.mxu0 %v159
    %1146 = vmatpush1.msra.mxu0 %v158
    %1147 = vmatprep.subr.mxu0 %v155
    %1148 = vmatpush1.msra.mxu0 %v154
    %1149 = vmatprep.subr.mxu0 %v151
    %1150 = vmatpush1.msra.mxu0 %v150
    %1151 = vmatprep.subr.mxu0 %v147
    %1152 = vmatpush1.msra.mxu0 %v146
    %1153 = vmatprep.subr.mxu0 %v143
    %1154 = vmatpush1.msra.mxu0 %v142
    %1155 = vmatprep.subr.mxu0 %v139
    %1156 = vmatpush1.msra.mxu0 %v138
    %1157 = vmatprep.subr.mxu0 %v135
    %1158 = vmatpush1.msra.mxu0 %v134
    %1159 = vmatprep.subr.mxu0 %v131
    %1160 = vmatpush1.msra.mxu0 %v130
    %1161 = vmatprep.subr.mxu0 %v127
    %1162 = vmatpush1.msra.mxu0 %v126
    %1163 = vmatprep.subr.mxu0 %v123
    %1164 = vmatpush1.msra.mxu0 %v122
    %1165 = vmatprep.subr.mxu0 %v119
    %1166 = vmatpush1.msra.mxu0 %v118
    %1167 = vmatprep.subr.mxu0 0.0
    %1168 = vmatpush2.msra.mxu0 0.0
    %1169 = vmatprep.subr.mxu0 0.0
    %1170 = vmatpush2.msra.mxu0 0.0
    %1171 = vmatprep.subr.mxu0 0.0
    %1172 = vmatpush2.msra.mxu0 0.0
    %1173 = vmatprep.subr.mxu0 0.0
    %1174 = vmatpush2.msra.mxu0 0.0
    %1175 = vmatprep.subr.mxu0 0.0
    %1176 = vmatpush2.msra.mxu0 0.0
    %1177 = vmatprep.subr.mxu0 0.0
    %1178 = vmatpush2.msra.mxu0 0.0
    %1179 = vmatprep.subr.mxu0 0.0
    %1180 = vmatpush2.msra.mxu0 0.0
    %1181 = vmatprep.subr.mxu0 0.0
    %1182 = vmatpush2.msra.mxu0 0.0
    %1183 = vmatprep.subr.mxu0 0.0
    %1184 = vmatpush2.msra.mxu0 0.0
    %1185 = vmatprep.subr.mxu0 0.0
    %1186 = vmatpush2.msra.mxu0 0.0
    %1187 = vmatprep.subr.mxu0 0.0
    %1188 = vmatpush2.msra.mxu0 0.0
    %1189 = vmatprep.subr.mxu0 0.0
    %1190 = vmatpush2.msra.mxu0 0.0
    %1191 = vmatprep.subr.mxu0 0.0
    %1192 = vmatpush2.msra.mxu0 0.0
    %1193 = vmatprep.subr.mxu0 0.0
    %1194 = vmatpush2.msra.mxu0 0.0
    %1195 = vmatprep.subr.mxu0 0.0
    %1196 = vmatpush2.msra.mxu0 0.0
    %1197 = vmatprep.subr.mxu0 0.0
    %1198 = vmatpush2.msra.mxu0 0.0
    %1199 = vmatprep.mubr.f32.mxu0 0.0
    %1200 = vmatmul.mubr.f32.gmra.mxu0 %v1134
    %v1201 = vpop.f32.mrf.mxu0
    %v1202 = vadd.f32 0.0, %v1201
    %v1203 = vpop.f32.mrf.mxu0
    %v1204 = vadd.f32 0.0, %v1203
    %1205 = vdwg.mxu0
    %1206 = vmatprep.subr.mxu0 %v181
    %1207 = vmatpush1.msra.mxu0 %v180
    %1208 = vmatprep.subr.mxu0 %v177
    %1209 = vmatpush1.msra.mxu0 %v176
    %1210 = vmatprep.subr.mxu0 %v173
    %1211 = vmatpush1.msra.mxu0 %v172
    %1212 = vmatprep.subr.mxu0 %v169
    %1213 = vmatpush1.msra.mxu0 %v168
    %1214 = vmatprep.subr.mxu0 %v165
    %1215 = vmatpush1.msra.mxu0 %v164
    %1216 = vmatprep.subr.mxu0 %v161
    %1217 = vmatpush1.msra.mxu0 %v160
    %1218 = vmatprep.subr.mxu0 %v157
    %1219 = vmatpush1.msra.mxu0 %v156
    %1220 = vmatprep.subr.mxu0 %v153
    %1221 = vmatpush1.msra.mxu0 %v152
    %1222 = vmatprep.subr.mxu0 %v149
    %1223 = vmatpush1.msra.mxu0 %v148
    %1224 = vmatprep.subr.mxu0 %v145
    %1225 = vmatpush1.msra.mxu0 %v144
    %1226 = vmatprep.subr.mxu0 %v141
    %1227 = vmatpush1.msra.mxu0 %v140
    %1228 = vmatprep.subr.mxu0 %v137
    %1229 = vmatpush1.msra.mxu0 %v136
    %1230 = vmatprep.subr.mxu0 %v133
    %1231 = vmatpush1.msra.mxu0 %v132
    %1232 = vmatprep.subr.mxu0 %v129
    %1233 = vmatpush1.msra.mxu0 %v128
    %1234 = vmatprep.subr.mxu0 %v125
    %1235 = vmatpush1.msra.mxu0 %v124
    %1236 = vmatprep.subr.mxu0 %v121
    %1237 = vmatpush1.msra.mxu0 %v120
    %1238 = vmatprep.subr.mxu0 0.0
    %1239 = vmatpush2.msra.mxu0 0.0
    %1240 = vmatprep.subr.mxu0 0.0
    %1241 = vmatpush2.msra.mxu0 0.0
    %1242 = vmatprep.subr.mxu0 0.0
    %1243 = vmatpush2.msra.mxu0 0.0
    %1244 = vmatprep.subr.mxu0 0.0
    %1245 = vmatpush2.msra.mxu0 0.0
    %1246 = vmatprep.subr.mxu0 0.0
    %1247 = vmatpush2.msra.mxu0 0.0
    %1248 = vmatprep.subr.mxu0 0.0
    %1249 = vmatpush2.msra.mxu0 0.0
    %1250 = vmatprep.subr.mxu0 0.0
    %1251 = vmatpush2.msra.mxu0 0.0
    %1252 = vmatprep.subr.mxu0 0.0
    %1253 = vmatpush2.msra.mxu0 0.0
    %1254 = vmatprep.subr.mxu0 0.0
    %1255 = vmatpush2.msra.mxu0 0.0
    %1256 = vmatprep.subr.mxu0 0.0
    %1257 = vmatpush2.msra.mxu0 0.0
    %1258 = vmatprep.subr.mxu0 0.0
    %1259 = vmatpush2.msra.mxu0 0.0
    %1260 = vmatprep.subr.mxu0 0.0
    %1261 = vmatpush2.msra.mxu0 0.0
    %1262 = vmatprep.subr.mxu0 0.0
    %1263 = vmatpush2.msra.mxu0 0.0
    %1264 = vmatprep.subr.mxu0 0.0
    %1265 = vmatpush2.msra.mxu0 0.0
    %1266 = vmatprep.subr.mxu0 0.0
    %1267 = vmatpush2.msra.mxu0 0.0
    %1268 = vmatprep.subr.mxu0 0.0
    %1269 = vmatpush2.msra.mxu0 0.0
    %1270 = vmatprep.mubr.f32.mxu0 0.0
    %1271 = vmatmul.mubr.f32.gmra.mxu0 %v1134
    %v1272 = vpop.f32.mrf.mxu0
    %v1273 = vadd.f32 0.0, %v1272
    %v1274 = vpop.f32.mrf.mxu0
    %v1275 = vadd.f32 0.0, %v1274
    %1276 = vdwg.mxu0
    %v1277 = vadd.f32 %v320, %v1202
    %v1278 = vadd.f32 %v322, %v1204
    %v1279 = vadd.f32 %v433, %v1273
    %v1280 = vadd.f32 %v435, %v1275
    %v1281 = vxor.u32 %v1277, 2147483648
    %v1282 = vmul.f32 %v1281, 1.442695
    %v1283 = vpow.pop %v1282
    %v1284 = vadd.f32 %v1283, 1.0
    %v1285 = vrcp.pop %v1284
    %v1286 = vmul.f32 1.0, %v1285
    %v1287 = vxor.u32 %v1278, 2147483648
    %v1288 = vmul.f32 %v1287, 1.442695
    %v1289 = vpow.pop %v1288
    %v1290 = vadd.f32 %v1289, 1.0
    %v1291 = vrcp.pop %v1290
    %v1292 = vmul.f32 1.0, %v1291
    %v1293 = vtanh.pop %v1279
    %v1294 = vxor.u32 %v1280, 2147483648
    %v1295 = vmul.f32 %v1294, 1.442695
    %v1296 = vpow.pop %v1295
    %v1297 = vadd.f32 %v1296, 1.0
    %v1298 = vrcp.pop %v1297
    %v1299 = vmul.f32 1.0, %v1298
    %v1300 = vmul.f32 %v1292, %v1132
    %v1301 = vmul.f32 %v1286, %v1293
    %v1302 = vadd.f32 %v1300, %v1301
    %v1303 = vtanh.pop %v1302
    %v1304 = vmul.f32 %v1299, %v1303
    %1305 = vmatprep.subr.mxu0 %v179
    %1306 = vmatpush1.msra.mxu0 %v178
    %1307 = vmatprep.subr.mxu0 %v175
    %1308 = vmatpush1.msra.mxu0 %v174
    %1309 = vmatprep.subr.mxu0 %v171
    %1310 = vmatpush1.msra.mxu0 %v170
    %1311 = vmatprep.subr.mxu0 %v167
    %1312 = vmatpush1.msra.mxu0 %v166
    %1313 = vmatprep.subr.mxu0 %v163
    %1314 = vmatpush1.msra.mxu0 %v162
    %1315 = vmatprep.subr.mxu0 %v159
    %1316 = vmatpush1.msra.mxu0 %v158
    %1317 = vmatprep.subr.mxu0 %v155
    %1318 = vmatpush1.msra.mxu0 %v154
    %1319 = vmatprep.subr.mxu0 %v151
    %1320 = vmatpush1.msra.mxu0 %v150
    %1321 = vmatprep.subr.mxu0 %v147
    %1322 = vmatpush1.msra.mxu0 %v146
    %1323 = vmatprep.subr.mxu0 %v143
    %1324 = vmatpush1.msra.mxu0 %v142
    %1325 = vmatprep.subr.mxu0 %v139
    %1326 = vmatpush1.msra.mxu0 %v138
    %1327 = vmatprep.subr.mxu0 %v135
    %1328 = vmatpush1.msra.mxu0 %v134
    %1329 = vmatprep.subr.mxu0 %v131
    %1330 = vmatpush1.msra.mxu0 %v130
    %1331 = vmatprep.subr.mxu0 %v127
    %1332 = vmatpush1.msra.mxu0 %v126
    %1333 = vmatprep.subr.mxu0 %v123
    %1334 = vmatpush1.msra.mxu0 %v122
    %1335 = vmatprep.subr.mxu0 %v119
    %1336 = vmatpush1.msra.mxu0 %v118
    %1337 = vmatprep.subr.mxu0 0.0
    %1338 = vmatpush2.msra.mxu0 0.0
    %1339 = vmatprep.subr.mxu0 0.0
    %1340 = vmatpush2.msra.mxu0 0.0
    %1341 = vmatprep.subr.mxu0 0.0
    %1342 = vmatpush2.msra.mxu0 0.0
    %1343 = vmatprep.subr.mxu0 0.0
    %1344 = vmatpush2.msra.mxu0 0.0
    %1345 = vmatprep.subr.mxu0 0.0
    %1346 = vmatpush2.msra.mxu0 0.0
    %1347 = vmatprep.subr.mxu0 0.0
    %1348 = vmatpush2.msra.mxu0 0.0
    %1349 = vmatprep.subr.mxu0 0.0
    %1350 = vmatpush2.msra.mxu0 0.0
    %1351 = vmatprep.subr.mxu0 0.0
    %1352 = vmatpush2.msra.mxu0 0.0
    %1353 = vmatprep.subr.mxu0 0.0
    %1354 = vmatpush2.msra.mxu0 0.0
    %1355 = vmatprep.subr.mxu0 0.0
    %1356 = vmatpush2.msra.mxu0 0.0
    %1357 = vmatprep.subr.mxu0 0.0
    %1358 = vmatpush2.msra.mxu0 0.0
    %1359 = vmatprep.subr.mxu0 0.0
    %1360 = vmatpush2.msra.mxu0 0.0
    %1361 = vmatprep.subr.mxu0 0.0
    %1362 = vmatpush2.msra.mxu0 0.0
    %1363 = vmatprep.subr.mxu0 0.0
    %1364 = vmatpush2.msra.mxu0 0.0
    %1365 = vmatprep.subr.mxu0 0.0
    %1366 = vmatpush2.msra.mxu0 0.0
    %1367 = vmatprep.subr.mxu0 0.0
    %1368 = vmatpush2.msra.mxu0 0.0
    %1369 = vmatprep.mubr.f32.mxu0 0.0
    %1370 = vmatmul.mubr.f32.gmra.mxu0 %v1304
    %v1371 = vpop.f32.mrf.mxu0
    %v1372 = vadd.f32 0.0, %v1371
    %v1373 = vpop.f32.mrf.mxu0
    %v1374 = vadd.f32 0.0, %v1373
    %1375 = vdwg.mxu0
    %1376 = vmatprep.subr.mxu0 %v181
    %1377 = vmatpush1.msra.mxu0 %v180
    %1378 = vmatprep.subr.mxu0 %v177
    %1379 = vmatpush1.msra.mxu0 %v176
    %1380 = vmatprep.subr.mxu0 %v173
    %1381 = vmatpush1.msra.mxu0 %v172
    %1382 = vmatprep.subr.mxu0 %v169
    %1383 = vmatpush1.msra.mxu0 %v168
    %1384 = vmatprep.subr.mxu0 %v165
    %1385 = vmatpush1.msra.mxu0 %v164
    %1386 = vmatprep.subr.mxu0 %v161
    %1387 = vmatpush1.msra.mxu0 %v160
    %1388 = vmatprep.subr.mxu0 %v157
    %1389 = vmatpush1.msra.mxu0 %v156
    %1390 = vmatprep.subr.mxu0 %v153
    %1391 = vmatpush1.msra.mxu0 %v152
    %1392 = vmatprep.subr.mxu0 %v149
    %1393 = vmatpush1.msra.mxu0 %v148
    %1394 = vmatprep.subr.mxu0 %v145
    %1395 = vmatpush1.msra.mxu0 %v144
    %1396 = vmatprep.subr.mxu0 %v141
    %1397 = vmatpush1.msra.mxu0 %v140
    %1398 = vmatprep.subr.mxu0 %v137
    %1399 = vmatpush1.msra.mxu0 %v136
    %1400 = vmatprep.subr.mxu0 %v133
    %1401 = vmatpush1.msra.mxu0 %v132
    %1402 = vmatprep.subr.mxu0 %v129
    %1403 = vmatpush1.msra.mxu0 %v128
    %1404 = vmatprep.subr.mxu0 %v125
    %1405 = vmatpush1.msra.mxu0 %v124
    %1406 = vmatprep.subr.mxu0 %v121
    %1407 = vmatpush1.msra.mxu0 %v120
    %1408 = vmatprep.subr.mxu0 0.0
    %1409 = vmatpush2.msra.mxu0 0.0
    %1410 = vmatprep.subr.mxu0 0.0
    %1411 = vmatpush2.msra.mxu0 0.0
    %1412 = vmatprep.subr.mxu0 0.0
    %1413 = vmatpush2.msra.mxu0 0.0
    %1414 = vmatprep.subr.mxu0 0.0
    %1415 = vmatpush2.msra.mxu0 0.0
    %1416 = vmatprep.subr.mxu0 0.0
    %1417 = vmatpush2.msra.mxu0 0.0
    %1418 = vmatprep.subr.mxu0 0.0
    %1419 = vmatpush2.msra.mxu0 0.0
    %1420 = vmatprep.subr.mxu0 0.0
    %1421 = vmatpush2.msra.mxu0 0.0
    %1422 = vmatprep.subr.mxu0 0.0
    %1423 = vmatpush2.msra.mxu0 0.0
    %1424 = vmatprep.subr.mxu0 0.0
    %1425 = vmatpush2.msra.mxu0 0.0
    %1426 = vmatprep.subr.mxu0 0.0
    %1427 = vmatpush2.msra.mxu0 0.0
    %1428 = vmatprep.subr.mxu0 0.0
    %1429 = vmatpush2.msra.mxu0 0.0
    %1430 = vmatprep.subr.mxu0 0.0
    %1431 = vmatpush2.msra.mxu0 0.0
    %1432 = vmatprep.subr.mxu0 0.0
    %1433 = vmatpush2.msra.mxu0 0.0
    %1434 = vmatprep.subr.mxu0 0.0
    %1435 = vmatpush2.msra.mxu0 0.0
    %1436 = vmatprep.subr.mxu0 0.0
    %1437 = vmatpush2.msra.mxu0 0.0
    %1438 = vmatprep.subr.mxu0 0.0
    %1439 = vmatpush2.msra.mxu0 0.0
    %1440 = vmatprep.mubr.f32.mxu0 0.0
    %1441 = vmatmul.mubr.f32.gmra.mxu0 %v1304
    %v1442 = vpop.f32.mrf.mxu0
    %v1443 = vadd.f32 0.0, %v1442
    %v1444 = vpop.f32.mrf.mxu0
    %v1445 = vadd.f32 0.0, %v1444
    %1446 = vdwg.mxu0
    %v1447 = vadd.f32 %v326, %v1372
    %v1448 = vadd.f32 %v328, %v1374
    %v1449 = vadd.f32 %v439, %v1443
    %v1450 = vadd.f32 %v441, %v1445
    %v1451 = vxor.u32 %v1447, 2147483648
    %v1452 = vmul.f32 %v1451, 1.442695
    %v1453 = vpow.pop %v1452
    %v1454 = vadd.f32 %v1453, 1.0
    %v1455 = vrcp.pop %v1454
    %v1456 = vmul.f32 1.0, %v1455
    %v1457 = vxor.u32 %v1448, 2147483648
    %v1458 = vmul.f32 %v1457, 1.442695
    %v1459 = vpow.pop %v1458
    %v1460 = vadd.f32 %v1459, 1.0
    %v1461 = vrcp.pop %v1460
    %v1462 = vmul.f32 1.0, %v1461
    %v1463 = vtanh.pop %v1449
    %v1464 = vxor.u32 %v1450, 2147483648
    %v1465 = vmul.f32 %v1464, 1.442695
    %v1466 = vpow.pop %v1465
    %v1467 = vadd.f32 %v1466, 1.0
    %v1468 = vrcp.pop %v1467
    %v1469 = vmul.f32 1.0, %v1468
    %v1470 = vmul.f32 %v1462, %v1302
    %v1471 = vmul.f32 %v1456, %v1463
    %v1472 = vadd.f32 %v1470, %v1471
    %v1473 = vtanh.pop %v1472
    %v1474 = vmul.f32 %v1469, %v1473
    %1475 = vmatprep.subr.mxu0 %v179
    %1476 = vmatpush1.msra.mxu0 %v178
    %1477 = vmatprep.subr.mxu0 %v175
    %1478 = vmatpush1.msra.mxu0 %v174
    %1479 = vmatprep.subr.mxu0 %v171
    %1480 = vmatpush1.msra.mxu0 %v170
    %1481 = vmatprep.subr.mxu0 %v167
    %1482 = vmatpush1.msra.mxu0 %v166
    %1483 = vmatprep.subr.mxu0 %v163
    %1484 = vmatpush1.msra.mxu0 %v162
    %1485 = vmatprep.subr.mxu0 %v159
    %1486 = vmatpush1.msra.mxu0 %v158
    %1487 = vmatprep.subr.mxu0 %v155
    %1488 = vmatpush1.msra.mxu0 %v154
    %1489 = vmatprep.subr.mxu0 %v151
    %1490 = vmatpush1.msra.mxu0 %v150
    %1491 = vmatprep.subr.mxu0 %v147
    %1492 = vmatpush1.msra.mxu0 %v146
    %1493 = vmatprep.subr.mxu0 %v143
    %1494 = vmatpush1.msra.mxu0 %v142
    %1495 = vmatprep.subr.mxu0 %v139
    %1496 = vmatpush1.msra.mxu0 %v138
    %1497 = vmatprep.subr.mxu0 %v135
    %1498 = vmatpush1.msra.mxu0 %v134
    %1499 = vmatprep.subr.mxu0 %v131
    %1500 = vmatpush1.msra.mxu0 %v130
    %1501 = vmatprep.subr.mxu0 %v127
    %1502 = vmatpush1.msra.mxu0 %v126
    %1503 = vmatprep.subr.mxu0 %v123
    %1504 = vmatpush1.msra.mxu0 %v122
    %1505 = vmatprep.subr.mxu0 %v119
    %1506 = vmatpush1.msra.mxu0 %v118
    %1507 = vmatprep.subr.mxu0 0.0
    %1508 = vmatpush2.msra.mxu0 0.0
    %1509 = vmatprep.subr.mxu0 0.0
    %1510 = vmatpush2.msra.mxu0 0.0
    %1511 = vmatprep.subr.mxu0 0.0
    %1512 = vmatpush2.msra.mxu0 0.0
    %1513 = vmatprep.subr.mxu0 0.0
    %1514 = vmatpush2.msra.mxu0 0.0
    %1515 = vmatprep.subr.mxu0 0.0
    %1516 = vmatpush2.msra.mxu0 0.0
    %1517 = vmatprep.subr.mxu0 0.0
    %1518 = vmatpush2.msra.mxu0 0.0
    %1519 = vmatprep.subr.mxu0 0.0
    %1520 = vmatpush2.msra.mxu0 0.0
    %1521 = vmatprep.subr.mxu0 0.0
    %1522 = vmatpush2.msra.mxu0 0.0
    %1523 = vmatprep.subr.mxu0 0.0
    %1524 = vmatpush2.msra.mxu0 0.0
    %1525 = vmatprep.subr.mxu0 0.0
    %1526 = vmatpush2.msra.mxu0 0.0
    %1527 = vmatprep.subr.mxu0 0.0
    %1528 = vmatpush2.msra.mxu0 0.0
    %1529 = vmatprep.subr.mxu0 0.0
    %1530 = vmatpush2.msra.mxu0 0.0
    %1531 = vmatprep.subr.mxu0 0.0
    %1532 = vmatpush2.msra.mxu0 0.0
    %1533 = vmatprep.subr.mxu0 0.0
    %1534 = vmatpush2.msra.mxu0 0.0
    %1535 = vmatprep.subr.mxu0 0.0
    %1536 = vmatpush2.msra.mxu0 0.0
    %1537 = vmatprep.subr.mxu0 0.0
    %1538 = vmatpush2.msra.mxu0 0.0
    %1539 = vmatprep.mubr.f32.mxu0 0.0
    %1540 = vmatmul.mubr.f32.gmra.mxu0 %v1474
    %v1541 = vpop.f32.mrf.mxu0
    %v1542 = vadd.f32 0.0, %v1541
    %v1543 = vpop.f32.mrf.mxu0
    %v1544 = vadd.f32 0.0, %v1543
    %1545 = vdwg.mxu0
    %1546 = vmatprep.subr.mxu0 %v181
    %1547 = vmatpush1.msra.mxu0 %v180
    %1548 = vmatprep.subr.mxu0 %v177
    %1549 = vmatpush1.msra.mxu0 %v176
    %1550 = vmatprep.subr.mxu0 %v173
    %1551 = vmatpush1.msra.mxu0 %v172
    %1552 = vmatprep.subr.mxu0 %v169
    %1553 = vmatpush1.msra.mxu0 %v168
    %1554 = vmatprep.subr.mxu0 %v165
    %1555 = vmatpush1.msra.mxu0 %v164
    %1556 = vmatprep.subr.mxu0 %v161
    %1557 = vmatpush1.msra.mxu0 %v160
    %1558 = vmatprep.subr.mxu0 %v157
    %1559 = vmatpush1.msra.mxu0 %v156
    %1560 = vmatprep.subr.mxu0 %v153
    %1561 = vmatpush1.msra.mxu0 %v152
    %1562 = vmatprep.subr.mxu0 %v149
    %1563 = vmatpush1.msra.mxu0 %v148
    %1564 = vmatprep.subr.mxu0 %v145
    %1565 = vmatpush1.msra.mxu0 %v144
    %1566 = vmatprep.subr.mxu0 %v141
    %1567 = vmatpush1.msra.mxu0 %v140
    %1568 = vmatprep.subr.mxu0 %v137
    %1569 = vmatpush1.msra.mxu0 %v136
    %1570 = vmatprep.subr.mxu0 %v133
    %1571 = vmatpush1.msra.mxu0 %v132
    %1572 = vmatprep.subr.mxu0 %v129
    %1573 = vmatpush1.msra.mxu0 %v128
    %1574 = vmatprep.subr.mxu0 %v125
    %1575 = vmatpush1.msra.mxu0 %v124
    %1576 = vmatprep.subr.mxu0 %v121
    %1577 = vmatpush1.msra.mxu0 %v120
    %1578 = vmatprep.subr.mxu0 0.0
    %1579 = vmatpush2.msra.mxu0 0.0
    %1580 = vmatprep.subr.mxu0 0.0
    %1581 = vmatpush2.msra.mxu0 0.0
    %1582 = vmatprep.subr.mxu0 0.0
    %1583 = vmatpush2.msra.mxu0 0.0
    %1584 = vmatprep.subr.mxu0 0.0
    %1585 = vmatpush2.msra.mxu0 0.0
    %1586 = vmatprep.subr.mxu0 0.0
    %1587 = vmatpush2.msra.mxu0 0.0
    %1588 = vmatprep.subr.mxu0 0.0
    %1589 = vmatpush2.msra.mxu0 0.0
    %1590 = vmatprep.subr.mxu0 0.0
    %1591 = vmatpush2.msra.mxu0 0.0
    %1592 = vmatprep.subr.mxu0 0.0
    %1593 = vmatpush2.msra.mxu0 0.0
    %1594 = vmatprep.subr.mxu0 0.0
    %1595 = vmatpush2.msra.mxu0 0.0
    %1596 = vmatprep.subr.mxu0 0.0
    %1597 = vmatpush2.msra.mxu0 0.0
    %1598 = vmatprep.subr.mxu0 0.0
    %1599 = vmatpush2.msra.mxu0 0.0
    %1600 = vmatprep.subr.mxu0 0.0
    %1601 = vmatpush2.msra.mxu0 0.0
    %1602 = vmatprep.subr.mxu0 0.0
    %1603 = vmatpush2.msra.mxu0 0.0
    %1604 = vmatprep.subr.mxu0 0.0
    %1605 = vmatpush2.msra.mxu0 0.0
    %1606 = vmatprep.subr.mxu0 0.0
    %1607 = vmatpush2.msra.mxu0 0.0
    %1608 = vmatprep.subr.mxu0 0.0
    %1609 = vmatpush2.msra.mxu0 0.0
    %1610 = vmatprep.mubr.f32.mxu0 0.0
    %1611 = vmatmul.mubr.f32.gmra.mxu0 %v1474
    %v1612 = vpop.f32.mrf.mxu0
    %v1613 = vadd.f32 0.0, %v1612
    %v1614 = vpop.f32.mrf.mxu0
    %v1615 = vadd.f32 0.0, %v1614
    %1616 = vdwg.mxu0
    %v1617 = vadd.f32 %v332, %v1542
    %v1618 = vadd.f32 %v334, %v1544
    %v1619 = vadd.f32 %v445, %v1613
    %v1620 = vadd.f32 %v447, %v1615
    %v1621 = vxor.u32 %v1617, 2147483648
    %v1622 = vmul.f32 %v1621, 1.442695
    %v1623 = vpow.pop %v1622
    %v1624 = vadd.f32 %v1623, 1.0
    %v1625 = vrcp.pop %v1624
    %v1626 = vmul.f32 1.0, %v1625
    %v1627 = vxor.u32 %v1618, 2147483648
    %v1628 = vmul.f32 %v1627, 1.442695
    %v1629 = vpow.pop %v1628
    %v1630 = vadd.f32 %v1629, 1.0
    %v1631 = vrcp.pop %v1630
    %v1632 = vmul.f32 1.0, %v1631
    %v1633 = vtanh.pop %v1619
    %v1634 = vxor.u32 %v1620, 2147483648
    %v1635 = vmul.f32 %v1634, 1.442695
    %v1636 = vpow.pop %v1635
    %v1637 = vadd.f32 %v1636, 1.0
    %v1638 = vrcp.pop %v1637
    %v1639 = vmul.f32 1.0, %v1638
    %v1640 = vmul.f32 %v1632, %v1472
    %v1641 = vmul.f32 %v1626, %v1633
    %v1642 = vadd.f32 %v1640, %v1641
    %v1643 = vtanh.pop %v1642
    %v1644 = vmul.f32 %v1639, %v1643
    %1645 = vmatprep.subr.mxu0 %v179
    %1646 = vmatpush1.msra.mxu0 %v178
    %1647 = vmatprep.subr.mxu0 %v175
    %1648 = vmatpush1.msra.mxu0 %v174
    %1649 = vmatprep.subr.mxu0 %v171
    %1650 = vmatpush1.msra.mxu0 %v170
    %1651 = vmatprep.subr.mxu0 %v167
    %1652 = vmatpush1.msra.mxu0 %v166
    %1653 = vmatprep.subr.mxu0 %v163
    %1654 = vmatpush1.msra.mxu0 %v162
    %1655 = vmatprep.subr.mxu0 %v159
    %1656 = vmatpush1.msra.mxu0 %v158
    %1657 = vmatprep.subr.mxu0 %v155
    %1658 = vmatpush1.msra.mxu0 %v154
    %1659 = vmatprep.subr.mxu0 %v151
    %1660 = vmatpush1.msra.mxu0 %v150
    %1661 = vmatprep.subr.mxu0 %v147
    %1662 = vmatpush1.msra.mxu0 %v146
    %1663 = vmatprep.subr.mxu0 %v143
    %1664 = vmatpush1.msra.mxu0 %v142
    %1665 = vmatprep.subr.mxu0 %v139
    %1666 = vmatpush1.msra.mxu0 %v138
    %1667 = vmatprep.subr.mxu0 %v135
    %1668 = vmatpush1.msra.mxu0 %v134
    %1669 = vmatprep.subr.mxu0 %v131
    %1670 = vmatpush1.msra.mxu0 %v130
    %1671 = vmatprep.subr.mxu0 %v127
    %1672 = vmatpush1.msra.mxu0 %v126
    %1673 = vmatprep.subr.mxu0 %v123
    %1674 = vmatpush1.msra.mxu0 %v122
    %1675 = vmatprep.subr.mxu0 %v119
    %1676 = vmatpush1.msra.mxu0 %v118
    %1677 = vmatprep.subr.mxu0 0.0
    %1678 = vmatpush2.msra.mxu0 0.0
    %1679 = vmatprep.subr.mxu0 0.0
    %1680 = vmatpush2.msra.mxu0 0.0
    %1681 = vmatprep.subr.mxu0 0.0
    %1682 = vmatpush2.msra.mxu0 0.0
    %1683 = vmatprep.subr.mxu0 0.0
    %1684 = vmatpush2.msra.mxu0 0.0
    %1685 = vmatprep.subr.mxu0 0.0
    %1686 = vmatpush2.msra.mxu0 0.0
    %1687 = vmatprep.subr.mxu0 0.0
    %1688 = vmatpush2.msra.mxu0 0.0
    %1689 = vmatprep.subr.mxu0 0.0
    %1690 = vmatpush2.msra.mxu0 0.0
    %1691 = vmatprep.subr.mxu0 0.0
    %1692 = vmatpush2.msra.mxu0 0.0
    %1693 = vmatprep.subr.mxu0 0.0
    %1694 = vmatpush2.msra.mxu0 0.0
    %1695 = vmatprep.subr.mxu0 0.0
    %1696 = vmatpush2.msra.mxu0 0.0
    %1697 = vmatprep.subr.mxu0 0.0
    %1698 = vmatpush2.msra.mxu0 0.0
    %1699 = vmatprep.subr.mxu0 0.0
    %1700 = vmatpush2.msra.mxu0 0.0
    %1701 = vmatprep.subr.mxu0 0.0
    %1702 = vmatpush2.msra.mxu0 0.0
    %1703 = vmatprep.subr.mxu0 0.0
    %1704 = vmatpush2.msra.mxu0 0.0
    %1705 = vmatprep.subr.mxu0 0.0
    %1706 = vmatpush2.msra.mxu0 0.0
    %1707 = vmatprep.subr.mxu0 0.0
    %1708 = vmatpush2.msra.mxu0 0.0
    %1709 = vmatprep.mubr.f32.mxu0 0.0
    %1710 = vmatmul.mubr.f32.gmra.mxu0 %v1644
    %v1711 = vpop.f32.mrf.mxu0
    %v1712 = vadd.f32 0.0, %v1711
    %v1713 = vpop.f32.mrf.mxu0
    %v1714 = vadd.f32 0.0, %v1713
    %1715 = vdwg.mxu0
    %1716 = vmatprep.subr.mxu0 %v181
    %1717 = vmatpush1.msra.mxu0 %v180
    %1718 = vmatprep.subr.mxu0 %v177
    %1719 = vmatpush1.msra.mxu0 %v176
    %1720 = vmatprep.subr.mxu0 %v173
    %1721 = vmatpush1.msra.mxu0 %v172
    %1722 = vmatprep.subr.mxu0 %v169
    %1723 = vmatpush1.msra.mxu0 %v168
    %1724 = vmatprep.subr.mxu0 %v165
    %1725 = vmatpush1.msra.mxu0 %v164
    %1726 = vmatprep.subr.mxu0 %v161
    %1727 = vmatpush1.msra.mxu0 %v160
    %1728 = vmatprep.subr.mxu0 %v157
    %1729 = vmatpush1.msra.mxu0 %v156
    %1730 = vmatprep.subr.mxu0 %v153
    %1731 = vmatpush1.msra.mxu0 %v152
    %1732 = vmatprep.subr.mxu0 %v149
    %1733 = vmatpush1.msra.mxu0 %v148
    %1734 = vmatprep.subr.mxu0 %v145
    %1735 = vmatpush1.msra.mxu0 %v144
    %1736 = vmatprep.subr.mxu0 %v141
    %1737 = vmatpush1.msra.mxu0 %v140
    %1738 = vmatprep.subr.mxu0 %v137
    %1739 = vmatpush1.msra.mxu0 %v136
    %1740 = vmatprep.subr.mxu0 %v133
    %1741 = vmatpush1.msra.mxu0 %v132
    %1742 = vmatprep.subr.mxu0 %v129
    %1743 = vmatpush1.msra.mxu0 %v128
    %1744 = vmatprep.subr.mxu0 %v125
    %1745 = vmatpush1.msra.mxu0 %v124
    %1746 = vmatprep.subr.mxu0 %v121
    %1747 = vmatpush1.msra.mxu0 %v120
    %1748 = vmatprep.subr.mxu0 0.0
    %1749 = vmatpush2.msra.mxu0 0.0
    %1750 = vmatprep.subr.mxu0 0.0
    %1751 = vmatpush2.msra.mxu0 0.0
    %1752 = vmatprep.subr.mxu0 0.0
    %1753 = vmatpush2.msra.mxu0 0.0
    %1754 = vmatprep.subr.mxu0 0.0
    %1755 = vmatpush2.msra.mxu0 0.0
    %1756 = vmatprep.subr.mxu0 0.0
    %1757 = vmatpush2.msra.mxu0 0.0
    %1758 = vmatprep.subr.mxu0 0.0
    %1759 = vmatpush2.msra.mxu0 0.0
    %1760 = vmatprep.subr.mxu0 0.0
    %1761 = vmatpush2.msra.mxu0 0.0
    %1762 = vmatprep.subr.mxu0 0.0
    %1763 = vmatpush2.msra.mxu0 0.0
    %1764 = vmatprep.subr.mxu0 0.0
    %1765 = vmatpush2.msra.mxu0 0.0
    %1766 = vmatprep.subr.mxu0 0.0
    %1767 = vmatpush2.msra.mxu0 0.0
    %1768 = vmatprep.subr.mxu0 0.0
    %1769 = vmatpush2.msra.mxu0 0.0
    %1770 = vmatprep.subr.mxu0 0.0
    %1771 = vmatpush2.msra.mxu0 0.0
    %1772 = vmatprep.subr.mxu0 0.0
    %1773 = vmatpush2.msra.mxu0 0.0
    %1774 = vmatprep.subr.mxu0 0.0
    %1775 = vmatpush2.msra.mxu0 0.0
    %1776 = vmatprep.subr.mxu0 0.0
    %1777 = vmatpush2.msra.mxu0 0.0
    %1778 = vmatprep.subr.mxu0 0.0
    %1779 = vmatpush2.msra.mxu0 0.0
    %1780 = vmatprep.mubr.f32.mxu0 0.0
    %1781 = vmatmul.mubr.f32.gmra.mxu0 %v1644
    %v1782 = vpop.f32.mrf.mxu0
    %v1783 = vadd.f32 0.0, %v1782
    %v1784 = vpop.f32.mrf.mxu0
    %v1785 = vadd.f32 0.0, %v1784
    %1786 = vdwg.mxu0
    %v1787 = vadd.f32 %v338, %v1712
    %v1788 = vadd.f32 %v340, %v1714
    %v1789 = vadd.f32 %v451, %v1783
    %v1790 = vadd.f32 %v453, %v1785
    %v1791 = vxor.u32 %v1787, 2147483648
    %v1792 = vmul.f32 %v1791, 1.442695
    %v1793 = vpow.pop %v1792
    %v1794 = vadd.f32 %v1793, 1.0
    %v1795 = vrcp.pop %v1794
    %v1796 = vmul.f32 1.0, %v1795
    %v1797 = vxor.u32 %v1788, 2147483648
    %v1798 = vmul.f32 %v1797, 1.442695
    %v1799 = vpow.pop %v1798
    %v1800 = vadd.f32 %v1799, 1.0
    %v1801 = vrcp.pop %v1800
    %v1802 = vmul.f32 1.0, %v1801
    %v1803 = vtanh.pop %v1789
    %v1804 = vxor.u32 %v1790, 2147483648
    %v1805 = vmul.f32 %v1804, 1.442695
    %v1806 = vpow.pop %v1805
    %v1807 = vadd.f32 %v1806, 1.0
    %v1808 = vrcp.pop %v1807
    %v1809 = vmul.f32 1.0, %v1808
    %v1810 = vmul.f32 %v1802, %v1642
    %v1811 = vmul.f32 %v1796, %v1803
    %v1812 = vadd.f32 %v1810, %v1811
    %v1813 = vtanh.pop %v1812
    %v1814 = vmul.f32 %v1809, %v1813
    %v1816 = vlaneseq
    %v1817 = vshrl.u32 %v1816, 7
    %v1818 = vsub.s32 0, %v1817
    %v1819 = vrot.slane %v199, %v1818
    %1821 = vmatprep.subr.mxu0 0.0
    %1822 = vmatpush1.msra.mxu0 %v197
    %1823 = vmatprep.subr.mxu0 0.0
    %1824 = vmatpush1.msra.mxu0 %v196
    %1825 = vmatprep.subr.mxu0 0.0
    %1826 = vmatpush1.msra.mxu0 %v195
    %1827 = vmatprep.subr.mxu0 0.0
    %1828 = vmatpush1.msra.mxu0 %v194
    %1829 = vmatprep.subr.mxu0 0.0
    %1830 = vmatpush1.msra.mxu0 %v193
    %1831 = vmatprep.subr.mxu0 0.0
    %1832 = vmatpush1.msra.mxu0 %v192
    %1833 = vmatprep.subr.mxu0 0.0
    %1834 = vmatpush1.msra.mxu0 %v191
    %1835 = vmatprep.subr.mxu0 0.0
    %1836 = vmatpush1.msra.mxu0 %v190
    %1837 = vmatprep.subr.mxu0 0.0
    %1838 = vmatpush1.msra.mxu0 %v189
    %1839 = vmatprep.subr.mxu0 0.0
    %1840 = vmatpush1.msra.mxu0 %v188
    %1841 = vmatprep.subr.mxu0 0.0
    %1842 = vmatpush1.msra.mxu0 %v187
    %1843 = vmatprep.subr.mxu0 0.0
    %1844 = vmatpush1.msra.mxu0 %v186
    %1845 = vmatprep.subr.mxu0 0.0
    %1846 = vmatpush1.msra.mxu0 %v185
    %1847 = vmatprep.subr.mxu0 0.0
    %1848 = vmatpush1.msra.mxu0 %v184
    %1849 = vmatprep.subr.mxu0 0.0
    %1850 = vmatpush1.msra.mxu0 %v183
    %1851 = vmatprep.subr.mxu0 0.0
    %1852 = vmatpush1.msra.mxu0 %v182
    %1853 = vmatprep.subr.mxu0 0.0
    %1854 = vmatpush2.msra.mxu0 0.0
    %1855 = vmatprep.subr.mxu0 0.0
    %1856 = vmatpush2.msra.mxu0 0.0
    %1857 = vmatprep.subr.mxu0 0.0
    %1858 = vmatpush2.msra.mxu0 0.0
    %1859 = vmatprep.subr.mxu0 0.0
    %1860 = vmatpush2.msra.mxu0 0.0
    %1861 = vmatprep.subr.mxu0 0.0
    %1862 = vmatpush2.msra.mxu0 0.0
    %1863 = vmatprep.subr.mxu0 0.0
    %1864 = vmatpush2.msra.mxu0 0.0
    %1865 = vmatprep.subr.mxu0 0.0
    %1866 = vmatpush2.msra.mxu0 0.0
    %1867 = vmatprep.subr.mxu0 0.0
    %1868 = vmatpush2.msra.mxu0 0.0
    %1869 = vmatprep.subr.mxu0 0.0
    %1870 = vmatpush2.msra.mxu0 0.0
    %1871 = vmatprep.subr.mxu0 0.0
    %1872 = vmatpush2.msra.mxu0 0.0
    %1873 = vmatprep.subr.mxu0 0.0
    %1874 = vmatpush2.msra.mxu0 0.0
    %1875 = vmatprep.subr.mxu0 0.0
    %1876 = vmatpush2.msra.mxu0 0.0
    %1877 = vmatprep.subr.mxu0 0.0
    %1878 = vmatpush2.msra.mxu0 0.0
    %1879 = vmatprep.subr.mxu0 0.0
    %1880 = vmatpush2.msra.mxu0 0.0
    %1881 = vmatprep.subr.mxu0 0.0
    %1882 = vmatpush2.msra.mxu0 0.0
    %1883 = vmatprep.subr.mxu0 0.0
    %1884 = vmatpush2.msra.mxu0 0.0
    %1885 = vmatprep.mubr.f32.mxu0 0.0
    %1886 = vmatmul.mubr.f32.gmra.mxu0 %v1814
    %v1887 = vpop.f32.mrf.mxu0
    %v1888 = vadd.f32 %v1819, %v1887
    %v1889 = vpop.f32.mrf.mxu0
    %1890 = vdwg.mxu0
    %1891 = vmax.xlane.f32.xlu0 %v1888
    %v1892 = vpop.xlane.xlu0 %1891
    %v1893 = vsub.f32 %v1888, %v1892
    %v1894 = vmul.f32 %v1893, 1.442695
    %v1895 = vpow.pop %v1894
    %1896 = vadd.xlane.f32.xlu0 %v1895
    %v1897 = vpop.xlane.xlu0 %1896
    %v1898 = vlog2.pop %v1897
    %v1899 = vmul.f32 %v1898, 0.6931472
    %v1900 = vsub.f32 %v1893, %v1899
    %1901 = vst [vmem:[#allocation8] sm:$0xff] %v1900
    // Predicated region
    $region26: #{tpu_custom_call.1} parent=1 // pred_check
      _
    $region27: #{tpu_custom_call.1} parent=1 // pred_check_branch
      %1903 = sbr.rel (0) target = $region29
    $region28: #{tpu_custom_call.1} parent=1 // pred_region
      %s1905 = ssub.s32 128, 128
      %1906 = vsyncadd [#allocation4], %s1905
      %s1908 = sshll.u32 [#allocation8], 4
      %s1909 = int_to_ptr.vmem [resolvable:$true] %s1908
      %1911 = dma.vmem_to_hbm [thread:$0]  %s1909, 128, %s3, [#allocation4]
    $region29: #{tpu_custom_call.1} parent=1 // pred_fallthru
      _
    // Predicated region
    $region30: #{tpu_custom_call.1} parent=1 // pred_check
      _
    $region31: #{tpu_custom_call.1} parent=1 // pred_check_branch
      %1913 = sbr.rel (0) target = $region33
    $region32: #{tpu_custom_call.1} parent=1 // pred_region
      %1914 = dma.done [#allocation4], 128
    $region33: #{tpu_custom_call.1} parent=1 // pred_fallthru
      _
    %1915 = vsyncpa [#allocation3], 1
    %1916 = vsyncpa [#allocation6], 1
    %1917 = vsyncpa [#allocation4], 1

</llo_original>
